<compile_context>
chip_gen: v6e
topology: v6e:2x2x1
jax: 0.10.0
libtpu: 0.0.40
codegen_flags: <defaults>
</compile_context>

<pallas_src>
import numpy as np
import jax
import jax.numpy as jnp
from jax.experimental import pallas as pl
from jax.experimental.pallas import tpu as pltpu

LN_EPS = 1e-5          # torch.nn.LayerNorm default
HEAD_LANE = 128        # pad concatenated head outputs to a lane-dense multiple of 128
SUBLANE = 8            # f32 sublane height
MAX_BATCH_BLOCK = 512  # max batch rows processed per grid step


def _round_up(x, m):
    return ((x + m - 1) // m) * m


# ---------------------------------------------------------------------------
# Fused Pallas kernel: all hidden blocks + concatenated heads in one body.
# Ref list: x, [per hidden layer: w, b, ln_gamma, ln_beta], head_w, head_b, out
# Weights/biases arrive already noise-combined (done in the wrapper).
# ---------------------------------------------------------------------------
def _make_fused_dqn_kernel(num_hidden):
    def kernel(*refs):
        x_ref = refs[0]
        o_ref = refs[-1]
        h = x_ref[...]                                          # (bb, F) f32
        idx = 1
        for _ in range(num_hidden):
            w_ref, b_ref, g_ref, beta_ref = refs[idx:idx + 4]
            idx += 4
            # x @ W^T expressed as a direct contraction (no XLU transpose).
            y = jax.lax.dot_general(
                h, w_ref[...], dimension_numbers=(((1,), (1,)), ((), ())),
                preferred_element_type=jnp.float32) + b_ref[...]  # (bb, O)
            # LayerNorm over last dim with two independent reductions.
            mean = jnp.mean(y, axis=-1, keepdims=True)
            mean_sq = jnp.mean(y * y, axis=-1, keepdims=True)
            var = jnp.maximum(mean_sq - mean * mean, 0.0)
            y = (y - mean) * jax.lax.rsqrt(var + LN_EPS)
            y = y * g_ref[...] + beta_ref[...]
            h = jnp.maximum(y, 0.0)                              # ReLU

        # Fused q + aux heads: single lane-dense matmul into a (bb, 128k) slab.
        hw_ref, hb_ref = refs[idx:idx + 2]
        o_ref[...] = jax.lax.dot_general(
            h, hw_ref[...], dimension_numbers=(((1,), (1,)), ((), ())),
            preferred_element_type=jnp.float32) + hb_ref[...]

    return kernel


# ---------------------------------------------------------------------------
# pallas_call wrapper (optionally single-buffering the resident weight blocks).
# ---------------------------------------------------------------------------
def _run_fused(x_pad, weights, bb, n_blk, head_pad, single_buffer_weights):
    B_pad, F = x_pad.shape
    num_hidden = (len(weights) - 2) // 4

    def rep_spec(a):
        nd = a.ndim
        idx_map = lambda i, _nd=nd: (0,) * _nd      # resident across batch tiles
        if single_buffer_weights:
            return pl.BlockSpec(a.shape, idx_map, pipeline_mode=pl.Buffered(1))
        return pl.BlockSpec(a.shape, idx_map)

    in_specs = [pl.BlockSpec((bb, F), lambda i: (i, 0))]
    in_specs += [rep_spec(a) for a in weights]

    return pl.pallas_call(
        _make_fused_dqn_kernel(num_hidden),
        out_shape=jax.ShapeDtypeStruct((B_pad, head_pad), jnp.float32),
        grid=(n_blk,),
        in_specs=in_specs,
        out_specs=pl.BlockSpec((bb, head_pad), lambda i: (i, 0)),
        compiler_params=pltpu.CompilerParams(
            dimension_semantics=("parallel",)),      # megacore split on v7x
    )(x_pad, *weights)


# ---------------------------------------------------------------------------
# Wrapper: one pallas_call for the whole forward.
# ---------------------------------------------------------------------------
def optimized_dqn_forward(x, params):
    B, F = x.shape
    hidden = params["hidden"]
    head = params["head"]
    head_pad = head["w_mu"].shape[0]                  # multiple of 128

    # Hoist the noisy combine out of the kernel: one elementwise pass per
    # forward; the kernel only sees the combined (O, I) weight and (1, O) bias.
    weights = []
    for layer in hidden:
        w = layer["w_mu"] + layer["w_sig"] * layer["w_eps"]
        b = layer["b_mu"] + layer["b_sig"] * layer["b_eps"]
        weights += [w, b, layer["ln_gamma"], layer["ln_beta"]]
    hw = head["w_mu"] + head["w_sig"] * head["w_eps"]
    hb = head["b_mu"] + head["b_sig"] * head["b_eps"]
    weights += [hw, hb]

    # Batch tiling: 8-row sublane alignment; ~B/2 per block (capped at 512) so
    # realistic batches give a >=2-step grid for the two v7x TensorCores.
    bb = min(MAX_BATCH_BLOCK, max(SUBLANE, _round_up(pl.cdiv(B, 2), SUBLANE)))
    n_blk = pl.cdiv(B, bb)
    B_pad = n_blk * bb
    x_pad = jnp.pad(x, ((0, B_pad - B), (0, 0))) if B_pad != B else x

    try:
        out = _run_fused(x_pad, weights, bb, n_blk, head_pad,
                         single_buffer_weights=True)
    except Exception:
        # pipeline_mode=pl.Buffered(1) not supported by this jax version;
        # rerun with default (double-buffered) specs.  Same kernel, same math.
        out = _run_fused(x_pad, weights, bb, n_blk, head_pad,
                         single_buffer_weights=False)

    out = out[:B]
    q_lo, q_hi = head["layout"]["__q__"]
    q_values = out[:, q_lo:q_hi]
    aux_predictions = {name: out[:, lo:hi]
                       for name, (lo, hi) in head["layout"].items()
                       if name != "__q__"}
    return q_values, aux_predictions


# ---------------------------------------------------------------------------
# Deterministic parameter construction (mirrors NoisyLinear.reset_parameters /
# reset_noise, and LayerNorm default init).
# ---------------------------------------------------------------------------
def _scale_noise(key, size):
    x = jax.random.normal(key, (size,), jnp.float32)
    return jnp.sign(x) * jnp.sqrt(jnp.abs(x))


def make_noisy_linear_params(key, in_f, out_f, std_init=0.5, with_ln=False):
    k1, k2, k3, k4 = jax.random.split(key, 4)
    mu_range = 1.0 / float(np.sqrt(in_f))
    w_mu = jax.random.uniform(k1, (out_f, in_f), jnp.float32, -mu_range, mu_range)
    b_mu = jax.random.uniform(k2, (out_f,), jnp.float32, -mu_range, mu_range)
    w_sig = jnp.full((out_f, in_f), std_init / float(np.sqrt(in_f)), jnp.float32)
    b_sig = jnp.full((out_f,), std_init / float(np.sqrt(out_f)), jnp.float32)
    eps_in = _scale_noise(k3, in_f)
    eps_out = _scale_noise(k4, out_f)
    w_eps = jnp.outer(eps_out, eps_in)
    b_eps = eps_out
    p = {
        "w_mu": w_mu, "w_sig": w_sig, "w_eps": w_eps,
        "b_mu": b_mu.reshape(1, out_f),
        "b_sig": b_sig.reshape(1, out_f),
        "b_eps": b_eps.reshape(1, out_f),
    }
    if with_ln:
        p["ln_gamma"] = jnp.ones((1, out_f), jnp.float32)
        p["ln_beta"] = jnp.zeros((1, out_f), jnp.float32)
    return p


def _concat_heads(q_p, aux_ps, in_f):
    """Concatenate q head + aux heads along the output dim and pad to 128 lanes."""
    pieces = [("__q__", q_p)] + list(aux_ps.items())
    layout = {}
    w_mu, w_sig, w_eps, b_mu, b_sig, b_eps = [], [], [], [], [], []
    off = 0
    for name, p in pieces:
        o = p["w_mu"].shape[0]
        layout[name] = (off, off + o)
        off += o
        w_mu.append(p["w_mu"]); w_sig.append(p["w_sig"]); w_eps.append(p["w_eps"])
        b_mu.append(p["b_mu"]); b_sig.append(p["b_sig"]); b_eps.append(p["b_eps"])
    total = off
    pad_to = _round_up(total, HEAD_LANE)
    pad = pad_to - total

    def cat_w(lst):
        w = jnp.concatenate(lst, axis=0)
        if pad:
            w = jnp.concatenate([w, jnp.zeros((pad, in_f), jnp.float32)], axis=0)
        return w

    def cat_b(lst):
        b = jnp.concatenate(lst, axis=1)
        if pad:
            b = jnp.concatenate([b, jnp.zeros((1, pad), jnp.float32)], axis=1)
        return b

    return {"w_mu": cat_w(w_mu), "w_sig": cat_w(w_sig), "w_eps": cat_w(w_eps),
            "b_mu": cat_b(b_mu), "b_sig": cat_b(b_sig), "b_eps": cat_b(b_eps),
            "layout": layout}


def build_dqn_params(key, input_dim, hidden_layers, output_dim,
                     aux_task_configs, noisy_std_init=0.5):
    params = {"hidden": []}
    prev = input_dim
    for h in hidden_layers:
        key, sub = jax.random.split(key)
        params["hidden"].append(
            make_noisy_linear_params(sub, prev, h, noisy_std_init, with_ln=True))
        prev = h
    key, sub = jax.random.split(key)
    q_p = make_noisy_linear_params(sub, prev, output_dim, noisy_std_init)
    aux_ps = {}
    for name, cfg in aux_task_configs.items():
        key, sub = jax.random.split(key)
        aux_ps[name] = make_noisy_linear_params(
            sub, prev, cfg.get("output_dim", 1), noisy_std_init)
    params["head"] = _concat_heads(q_p, aux_ps, prev)
    return params


# ---------------------------------------------------------------------------
# Pure numpy reference (torch-exact math) for a correctness check.
# ---------------------------------------------------------------------------
def _reference_forward(x, params):
    h = np.asarray(x, np.float32)
    for layer in params["hidden"]:
        w = np.asarray(layer["w_mu"]) + np.asarray(layer["w_sig"]) * np.asarray(layer["w_eps"])
        b = np.asarray(layer["b_mu"]) + np.asarray(layer["b_sig"]) * np.asarray(layer["b_eps"])
        y = h @ w.T + b
        mean = y.mean(-1, keepdims=True)
        var = ((y - mean) ** 2).mean(-1, keepdims=True)
        y = (y - mean) / np.sqrt(var + LN_EPS)
        y = y * np.asarray(layer["ln_gamma"]) + np.asarray(layer["ln_beta"])
        h = np.maximum(y, 0.0)
    head = params["head"]
    w = np.asarray(head["w_mu"]) + np.asarray(head["w_sig"]) * np.asarray(head["w_eps"])
    b = np.asarray(head["b_mu"]) + np.asarray(head["b_sig"]) * np.asarray(head["b_eps"])
    out = h @ w.T + b
    q_lo, q_hi = head["layout"]["__q__"]
    q = out[:, q_lo:q_hi]
    aux = {n: out[:, lo:hi] for n, (lo, hi) in head["layout"].items() if n != "__q__"}
    return q, aux


# TODO(synk): the 'cnn' network_type branch (Conv2d/BatchNorm/MaxPool/Transformer)
# is not exercised here; only the 'feed_forward' + NoisyLinear path is implemented.
# reset_noise() (resampling w_eps/b_eps) is a host-side param rebuild, not in-kernel.

if __name__ == "__main__":
    # Configuration: network_type='feed_forward', input_dim=32, output_dim=4,
    # hidden_layers=[64, 32], dropout_rate=0.0, use_noisy_net=True,
    # enable_aux_tasks=True with one aux head of output_dim=1.
    BATCH = 2
    INPUT_DIM = 32
    HIDDEN = [64, 32]
    OUTPUT_DIM = 4
    AUX_CFG = {"value_pred": {"output_dim": 1}}

    key = jax.random.PRNGKey(0)
    key, pkey, xkey = jax.random.split(key, 3)

    params = build_dqn_params(pkey, INPUT_DIM, HIDDEN, OUTPUT_DIM, AUX_CFG,
                              noisy_std_init=0.5)
    x = jax.random.normal(xkey, (BATCH, INPUT_DIM), jnp.float32)

    q_values, aux_predictions = optimized_dqn_forward(x, params)
    jax.block_until_ready(q_values)
    for v in aux_predictions.values():
        jax.block_until_ready(v)

    assert q_values.shape == (BATCH, OUTPUT_DIM)
    assert aux_predictions["value_pred"].shape == (BATCH, 1)
    assert jnp.all(jnp.isfinite(q_values))

    # Correctness check against a plain numpy reference of the same math
    # (tolerance tightened vs. previous version).
    q_ref, aux_ref = _reference_forward(x, params)
    assert np.allclose(np.asarray(q_values), q_ref, rtol=1e-4, atol=1e-4)
    for name, pred in aux_predictions.items():
        assert np.allclose(np.asarray(pred), aux_ref[name], rtol=1e-4, atol=1e-4)

    print("KERNEL_OK")
</pallas_src>

<mosaic_0001>
module attributes {stable_mosaic.version = 11 : i64} {
  func.func @kernel(%arg0: i32, %arg1: memref<8x32xf32, #tpu.memory_space<vmem>>, %arg2: memref<64x32xf32, #tpu.memory_space<vmem>>, %arg3: memref<1x64xf32, #tpu.memory_space<vmem>>, %arg4: memref<1x64xf32, #tpu.memory_space<vmem>>, %arg5: memref<1x64xf32, #tpu.memory_space<vmem>>, %arg6: memref<32x64xf32, #tpu.memory_space<vmem>>, %arg7: memref<1x32xf32, #tpu.memory_space<vmem>>, %arg8: memref<1x32xf32, #tpu.memory_space<vmem>>, %arg9: memref<1x32xf32, #tpu.memory_space<vmem>>, %arg10: memref<128x32xf32, #tpu.memory_space<vmem>>, %arg11: memref<1x128xf32, #tpu.memory_space<vmem>>, %arg12: memref<8x128xf32, #tpu.memory_space<vmem>>) attributes {dimension_semantics = [#tpu.dimension_semantics<parallel>], iteration_bounds = array<i64: 1>, scalar_prefetch = 0 : i64, scratch_operands = 0 : i64, tpu.core_type = #tpu.core_type<tc>, window_params = [{transform_indices = @transform_0, window_bounds = array<i64: 8, 32>}, {pipeline_mode = #tpu.pipeline_mode<synchronous>, transform_indices = @transform_1, window_bounds = array<i64: 64, 32>}, {pipeline_mode = #tpu.pipeline_mode<synchronous>, transform_indices = @transform_2, window_bounds = array<i64: 1, 64>}, {pipeline_mode = #tpu.pipeline_mode<synchronous>, transform_indices = @transform_3, window_bounds = array<i64: 1, 64>}, {pipeline_mode = #tpu.pipeline_mode<synchronous>, transform_indices = @transform_4, window_bounds = array<i64: 1, 64>}, {pipeline_mode = #tpu.pipeline_mode<synchronous>, transform_indices = @transform_5, window_bounds = array<i64: 32, 64>}, {pipeline_mode = #tpu.pipeline_mode<synchronous>, transform_indices = @transform_6, window_bounds = array<i64: 1, 32>}, {pipeline_mode = #tpu.pipeline_mode<synchronous>, transform_indices = @transform_7, window_bounds = array<i64: 1, 32>}, {pipeline_mode = #tpu.pipeline_mode<synchronous>, transform_indices = @transform_8, window_bounds = array<i64: 1, 32>}, {pipeline_mode = #tpu.pipeline_mode<synchronous>, transform_indices = @transform_9, window_bounds = array<i64: 128, 32>}, {pipeline_mode = #tpu.pipeline_mode<synchronous>, transform_indices = @transform_10, window_bounds = array<i64: 1, 128>}, {transform_indices = @transform_11, window_bounds = array<i64: 8, 128>}]} {
    %c0 = arith.constant 0 : index
    %c0_0 = arith.constant 0 : index
    %0 = vector.load %arg1[%c0, %c0_0] : memref<8x32xf32, #tpu.memory_space<vmem>>, vector<8x32xf32>
    %c0_1 = arith.constant 0 : index
    %c0_2 = arith.constant 0 : index
    %1 = vector.load %arg2[%c0_1, %c0_2] : memref<64x32xf32, #tpu.memory_space<vmem>>, vector<64x32xf32>
    %cst = arith.constant dense<0.000000e+00> : vector<8x64xf32>
    %2 = tpu.matmul %0, %1, %cst {dimension_numbers = #tpu.dot_dimension_numbers<[1], [1], [0], [0], [0, 0, 1, 0], [], []>} : vector<8x32xf32>, vector<64x32xf32>, vector<8x64xf32> -> vector<8x64xf32>
    %c0_3 = arith.constant 0 : index
    %c0_4 = arith.constant 0 : index
    %3 = vector.load %arg3[%c0_3, %c0_4] : memref<1x64xf32, #tpu.memory_space<vmem>>, vector<1x64xf32>
    %4 = vector.broadcast %3 : vector<1x64xf32> to vector<8x64xf32>
    %5 = arith.addf %2, %4 : vector<8x64xf32>
    %cst_5 = arith.constant dense<0.000000e+00> : vector<8xf32>
    %6 = vector.multi_reduction <add>, %5, %cst_5 [1] : vector<8x64xf32> to vector<8xf32>
    %7 = vector.shape_cast %6 : vector<8xf32> to vector<8x1xf32>
    %cst_6 = arith.constant 6.400000e+01 : f32
    %8 = vector.broadcast %cst_6 : f32 to vector<8x1xf32>
    %9 = arith.divf %7, %8 : vector<8x1xf32>
    %10 = arith.mulf %5, %5 : vector<8x64xf32>
    %cst_7 = arith.constant dense<0.000000e+00> : vector<8xf32>
    %11 = vector.multi_reduction <add>, %10, %cst_7 [1] : vector<8x64xf32> to vector<8xf32>
    %12 = vector.shape_cast %11 : vector<8xf32> to vector<8x1xf32>
    %cst_8 = arith.constant 6.400000e+01 : f32
    %13 = vector.broadcast %cst_8 : f32 to vector<8x1xf32>
    %14 = arith.divf %12, %13 : vector<8x1xf32>
    %15 = arith.mulf %9, %9 : vector<8x1xf32>
    %16 = arith.subf %14, %15 : vector<8x1xf32>
    %cst_9 = arith.constant 0.000000e+00 : f32
    %17 = vector.broadcast %cst_9 : f32 to vector<8x1xf32>
    %18 = arith.maximumf %16, %17 : vector<8x1xf32>
    %19 = vector.broadcast %9 : vector<8x1xf32> to vector<8x64xf32>
    %20 = arith.subf %5, %19 : vector<8x64xf32>
    %cst_10 = arith.constant 9.99999974E-6 : f32
    %21 = vector.broadcast %cst_10 : f32 to vector<8x1xf32>
    %22 = arith.addf %18, %21 : vector<8x1xf32>
    %23 = math.rsqrt %22 : vector<8x1xf32>
    %24 = vector.broadcast %23 : vector<8x1xf32> to vector<8x64xf32>
    %25 = arith.mulf %20, %24 : vector<8x64xf32>
    %c0_11 = arith.constant 0 : index
    %c0_12 = arith.constant 0 : index
    %26 = vector.load %arg4[%c0_11, %c0_12] : memref<1x64xf32, #tpu.memory_space<vmem>>, vector<1x64xf32>
    %27 = vector.broadcast %26 : vector<1x64xf32> to vector<8x64xf32>
    %28 = arith.mulf %25, %27 : vector<8x64xf32>
    %c0_13 = arith.constant 0 : index
    %c0_14 = arith.constant 0 : index
    %29 = vector.load %arg5[%c0_13, %c0_14] : memref<1x64xf32, #tpu.memory_space<vmem>>, vector<1x64xf32>
    %30 = vector.broadcast %29 : vector<1x64xf32> to vector<8x64xf32>
    %31 = arith.addf %28, %30 : vector<8x64xf32>
    %cst_15 = arith.constant 0.000000e+00 : f32
    %32 = vector.broadcast %cst_15 : f32 to vector<8x64xf32>
    %33 = arith.maximumf %31, %32 : vector<8x64xf32>
    %c0_16 = arith.constant 0 : index
    %c0_17 = arith.constant 0 : index
    %34 = vector.load %arg6[%c0_16, %c0_17] : memref<32x64xf32, #tpu.memory_space<vmem>>, vector<32x64xf32>
    %cst_18 = arith.constant dense<0.000000e+00> : vector<8x32xf32>
    %35 = tpu.matmul %33, %34, %cst_18 {dimension_numbers = #tpu.dot_dimension_numbers<[1], [1], [0], [0], [0, 0, 1, 0], [], []>} : vector<8x64xf32>, vector<32x64xf32>, vector<8x32xf32> -> vector<8x32xf32>
    %c0_19 = arith.constant 0 : index
    %c0_20 = arith.constant 0 : index
    %36 = vector.load %arg7[%c0_19, %c0_20] : memref<1x32xf32, #tpu.memory_space<vmem>>, vector<1x32xf32>
    %37 = vector.broadcast %36 : vector<1x32xf32> to vector<8x32xf32>
    %38 = arith.addf %35, %37 : vector<8x32xf32>
    %cst_21 = arith.constant dense<0.000000e+00> : vector<8xf32>
    %39 = vector.multi_reduction <add>, %38, %cst_21 [1] : vector<8x32xf32> to vector<8xf32>
    %40 = vector.shape_cast %39 : vector<8xf32> to vector<8x1xf32>
    %cst_22 = arith.constant 3.200000e+01 : f32
    %41 = vector.broadcast %cst_22 : f32 to vector<8x1xf32>
    %42 = arith.divf %40, %41 : vector<8x1xf32>
    %43 = arith.mulf %38, %38 : vector<8x32xf32>
    %cst_23 = arith.constant dense<0.000000e+00> : vector<8xf32>
    %44 = vector.multi_reduction <add>, %43, %cst_23 [1] : vector<8x32xf32> to vector<8xf32>
    %45 = vector.shape_cast %44 : vector<8xf32> to vector<8x1xf32>
    %cst_24 = arith.constant 3.200000e+01 : f32
    %46 = vector.broadcast %cst_24 : f32 to vector<8x1xf32>
    %47 = arith.divf %45, %46 : vector<8x1xf32>
    %48 = arith.mulf %42, %42 : vector<8x1xf32>
    %49 = arith.subf %47, %48 : vector<8x1xf32>
    %cst_25 = arith.constant 0.000000e+00 : f32
    %50 = vector.broadcast %cst_25 : f32 to vector<8x1xf32>
    %51 = arith.maximumf %49, %50 : vector<8x1xf32>
    %52 = vector.broadcast %42 : vector<8x1xf32> to vector<8x32xf32>
    %53 = arith.subf %38, %52 : vector<8x32xf32>
    %cst_26 = arith.constant 9.99999974E-6 : f32
    %54 = vector.broadcast %cst_26 : f32 to vector<8x1xf32>
    %55 = arith.addf %51, %54 : vector<8x1xf32>
    %56 = math.rsqrt %55 : vector<8x1xf32>
    %57 = vector.broadcast %56 : vector<8x1xf32> to vector<8x32xf32>
    %58 = arith.mulf %53, %57 : vector<8x32xf32>
    %c0_27 = arith.constant 0 : index
    %c0_28 = arith.constant 0 : index
    %59 = vector.load %arg8[%c0_27, %c0_28] : memref<1x32xf32, #tpu.memory_space<vmem>>, vector<1x32xf32>
    %60 = vector.broadcast %59 : vector<1x32xf32> to vector<8x32xf32>
    %61 = arith.mulf %58, %60 : vector<8x32xf32>
    %c0_29 = arith.constant 0 : index
    %c0_30 = arith.constant 0 : index
    %62 = vector.load %arg9[%c0_29, %c0_30] : memref<1x32xf32, #tpu.memory_space<vmem>>, vector<1x32xf32>
    %63 = vector.broadcast %62 : vector<1x32xf32> to vector<8x32xf32>
    %64 = arith.addf %61, %63 : vector<8x32xf32>
    %cst_31 = arith.constant 0.000000e+00 : f32
    %65 = vector.broadcast %cst_31 : f32 to vector<8x32xf32>
    %66 = arith.maximumf %64, %65 : vector<8x32xf32>
    %c0_32 = arith.constant 0 : index
    %c0_33 = arith.constant 0 : index
    %67 = vector.load %arg10[%c0_32, %c0_33] : memref<128x32xf32, #tpu.memory_space<vmem>>, vector<128x32xf32>
    %cst_34 = arith.constant dense<0.000000e+00> : vector<8x128xf32>
    %68 = tpu.matmul %66, %67, %cst_34 {dimension_numbers = #tpu.dot_dimension_numbers<[1], [1], [0], [0], [0, 0, 1, 0], [], []>} : vector<8x32xf32>, vector<128x32xf32>, vector<8x128xf32> -> vector<8x128xf32>
    %c0_35 = arith.constant 0 : index
    %c0_36 = arith.constant 0 : index
    %69 = vector.load %arg11[%c0_35, %c0_36] : memref<1x128xf32, #tpu.memory_space<vmem>>, vector<1x128xf32>
    %70 = vector.broadcast %69 : vector<1x128xf32> to vector<8x128xf32>
    %71 = arith.addf %68, %70 : vector<8x128xf32>
    %c0_37 = arith.constant 0 : index
    %c0_38 = arith.constant 0 : index
    %72 = vector.load %arg12[%c0_37, %c0_38] : memref<8x128xf32, #tpu.memory_space<vmem>>, vector<8x128xf32>
    tpu.vector_store %arg12[%c0_37, %c0_38], %71 {strides = array<i32>} : memref<8x128xf32, #tpu.memory_space<vmem>>, vector<8x128xf32>,
    return
  }
  func.func @transform_0(%arg0: i32) -> (i32, i32) {
    %c0_i32 = arith.constant 0 : i32
    %c0_i32_0 = arith.constant 0 : i32
    return %arg0, %c0_i32 : i32, i32
  }
  func.func @transform_1(%arg0: i32) -> (i32, i32) {
    %c0_i32 = arith.constant 0 : i32
    %c0_i32_0 = arith.constant 0 : i32
    %c0_i32_1 = arith.constant 0 : i32
    return %c0_i32, %c0_i32_0 : i32, i32
  }
  func.func @transform_2(%arg0: i32) -> (i32, i32) {
    %c0_i32 = arith.constant 0 : i32
    %c0_i32_0 = arith.constant 0 : i32
    %c0_i32_1 = arith.constant 0 : i32
    return %c0_i32, %c0_i32_0 : i32, i32
  }
  func.func @transform_3(%arg0: i32) -> (i32, i32) {
    %c0_i32 = arith.constant 0 : i32
    %c0_i32_0 = arith.constant 0 : i32
    %c0_i32_1 = arith.constant 0 : i32
    return %c0_i32, %c0_i32_0 : i32, i32
  }
  func.func @transform_4(%arg0: i32) -> (i32, i32) {
    %c0_i32 = arith.constant 0 : i32
    %c0_i32_0 = arith.constant 0 : i32
    %c0_i32_1 = arith.constant 0 : i32
    return %c0_i32, %c0_i32_0 : i32, i32
  }
  func.func @transform_5(%arg0: i32) -> (i32, i32) {
    %c0_i32 = arith.constant 0 : i32
    %c0_i32_0 = arith.constant 0 : i32
    %c0_i32_1 = arith.constant 0 : i32
    return %c0_i32, %c0_i32_0 : i32, i32
  }
  func.func @transform_6(%arg0: i32) -> (i32, i32) {
    %c0_i32 = arith.constant 0 : i32
    %c0_i32_0 = arith.constant 0 : i32
    %c0_i32_1 = arith.constant 0 : i32
    return %c0_i32, %c0_i32_0 : i32, i32
  }
  func.func @transform_7(%arg0: i32) -> (i32, i32) {
    %c0_i32 = arith.constant 0 : i32
    %c0_i32_0 = arith.constant 0 : i32
    %c0_i32_1 = arith.constant 0 : i32
    return %c0_i32, %c0_i32_0 : i32, i32
  }
  func.func @transform_8(%arg0: i32) -> (i32, i32) {
    %c0_i32 = arith.constant 0 : i32
    %c0_i32_0 = arith.constant 0 : i32
    %c0_i32_1 = arith.constant 0 : i32
    return %c0_i32, %c0_i32_0 : i32, i32
  }
  func.func @transform_9(%arg0: i32) -> (i32, i32) {
    %c0_i32 = arith.constant 0 : i32
    %c0_i32_0 = arith.constant 0 : i32
    %c0_i32_1 = arith.constant 0 : i32
    return %c0_i32, %c0_i32_0 : i32, i32
  }
  func.func @transform_10(%arg0: i32) -> (i32, i32) {
    %c0_i32 = arith.constant 0 : i32
    %c0_i32_0 = arith.constant 0 : i32
    %c0_i32_1 = arith.constant 0 : i32
    return %c0_i32, %c0_i32_0 : i32, i32
  }
  func.func @transform_11(%arg0: i32) -> (i32, i32) {
    %c0_i32 = arith.constant 0 : i32
    %c0_i32_0 = arith.constant 0 : i32
    return %arg0, %c0_i32 : i32, i32
  }
}

module attributes {stable_mosaic.version = 11 : i64} {
  func.func @kernel(%arg0: i32, %arg1: memref<8x32xf32, #tpu.memory_space<vmem>>, %arg2: memref<64x32xf32, #tpu.memory_space<vmem>>, %arg3: memref<1x64xf32, #tpu.memory_space<vmem>>, %arg4: memref<1x64xf32, #tpu.memory_space<vmem>>, %arg5: memref<1x64xf32, #tpu.memory_space<vmem>>, %arg6: memref<32x64xf32, #tpu.memory_space<vmem>>, %arg7: memref<1x32xf32, #tpu.memory_space<vmem>>, %arg8: memref<1x32xf32, #tpu.memory_space<vmem>>, %arg9: memref<1x32xf32, #tpu.memory_space<vmem>>, %arg10: memref<128x32xf32, #tpu.memory_space<vmem>>, %arg11: memref<1x128xf32, #tpu.memory_space<vmem>>, %arg12: memref<8x128xf32, #tpu.memory_space<vmem>>) attributes {dimension_semantics = [#tpu.dimension_semantics<parallel>], iteration_bounds = array<i64: 1>, scalar_prefetch = 0 : i64, scratch_operands = 0 : i64, tpu.core_type = #tpu.core_type<tc>, window_params = [{transform_indices = @transform_0, window_bounds = array<i64: 8, 32>}, {pipeline_mode = #tpu.pipeline_mode<synchronous>, transform_indices = @transform_1, window_bounds = array<i64: 64, 32>}, {pipeline_mode = #tpu.pipeline_mode<synchronous>, transform_indices = @transform_2, window_bounds = array<i64: 1, 64>}, {pipeline_mode = #tpu.pipeline_mode<synchronous>, transform_indices = @transform_3, window_bounds = array<i64: 1, 64>}, {pipeline_mode = #tpu.pipeline_mode<synchronous>, transform_indices = @transform_4, window_bounds = array<i64: 1, 64>}, {pipeline_mode = #tpu.pipeline_mode<synchronous>, transform_indices = @transform_5, window_bounds = array<i64: 32, 64>}, {pipeline_mode = #tpu.pipeline_mode<synchronous>, transform_indices = @transform_6, window_bounds = array<i64: 1, 32>}, {pipeline_mode = #tpu.pipeline_mode<synchronous>, transform_indices = @transform_7, window_bounds = array<i64: 1, 32>}, {pipeline_mode = #tpu.pipeline_mode<synchronous>, transform_indices = @transform_8, window_bounds = array<i64: 1, 32>}, {pipeline_mode = #tpu.pipeline_mode<synchronous>, transform_indices = @transform_9, window_bounds = array<i64: 128, 32>}, {pipeline_mode = #tpu.pipeline_mode<synchronous>, transform_indices = @transform_10, window_bounds = array<i64: 1, 128>}, {transform_indices = @transform_11, window_bounds = array<i64: 8, 128>}]} {
    %c0 = arith.constant 0 : index
    %c0_0 = arith.constant 0 : index
    %0 = vector.load %arg1[%c0, %c0_0] : memref<8x32xf32, #tpu.memory_space<vmem>>, vector<8x32xf32>
    %c0_1 = arith.constant 0 : index
    %c0_2 = arith.constant 0 : index
    %1 = vector.load %arg2[%c0_1, %c0_2] : memref<64x32xf32, #tpu.memory_space<vmem>>, vector<64x32xf32>
    %cst = arith.constant dense<0.000000e+00> : vector<8x64xf32>
    %2 = tpu.matmul %0, %1, %cst {dimension_numbers = #tpu.dot_dimension_numbers<[1], [1], [0], [0], [0, 0, 1, 0], [], []>} : vector<8x32xf32>, vector<64x32xf32>, vector<8x64xf32> -> vector<8x64xf32>
    %c0_3 = arith.constant 0 : index
    %c0_4 = arith.constant 0 : index
    %3 = vector.load %arg3[%c0_3, %c0_4] : memref<1x64xf32, #tpu.memory_space<vmem>>, vector<1x64xf32>
    %4 = vector.broadcast %3 : vector<1x64xf32> to vector<8x64xf32>
    %5 = arith.addf %2, %4 : vector<8x64xf32>
    %cst_5 = arith.constant dense<0.000000e+00> : vector<8xf32>
    %6 = vector.multi_reduction <add>, %5, %cst_5 [1] : vector<8x64xf32> to vector<8xf32>
    %7 = vector.shape_cast %6 : vector<8xf32> to vector<8x1xf32>
    %cst_6 = arith.constant 6.400000e+01 : f32
    %8 = vector.broadcast %cst_6 : f32 to vector<8x1xf32>
    %9 = arith.divf %7, %8 : vector<8x1xf32>
    %10 = arith.mulf %5, %5 : vector<8x64xf32>
    %cst_7 = arith.constant dense<0.000000e+00> : vector<8xf32>
    %11 = vector.multi_reduction <add>, %10, %cst_7 [1] : vector<8x64xf32> to vector<8xf32>
    %12 = vector.shape_cast %11 : vector<8xf32> to vector<8x1xf32>
    %cst_8 = arith.constant 6.400000e+01 : f32
    %13 = vector.broadcast %cst_8 : f32 to vector<8x1xf32>
    %14 = arith.divf %12, %13 : vector<8x1xf32>
    %15 = arith.mulf %9, %9 : vector<8x1xf32>
    %16 = arith.subf %14, %15 : vector<8x1xf32>
    %cst_9 = arith.constant 0.000000e+00 : f32
    %17 = vector.broadcast %cst_9 : f32 to vector<8x1xf32>
    %18 = arith.maximumf %16, %17 : vector<8x1xf32>
    %19 = vector.broadcast %9 : vector<8x1xf32> to vector<8x64xf32>
    %20 = arith.subf %5, %19 : vector<8x64xf32>
    %cst_10 = arith.constant 9.99999974E-6 : f32
    %21 = vector.broadcast %cst_10 : f32 to vector<8x1xf32>
    %22 = arith.addf %18, %21 : vector<8x1xf32>
    %23 = math.rsqrt %22 : vector<8x1xf32>
    %24 = vector.broadcast %23 : vector<8x1xf32> to vector<8x64xf32>
    %25 = arith.mulf %20, %24 : vector<8x64xf32>
    %c0_11 = arith.constant 0 : index
    %c0_12 = arith.constant 0 : index
    %26 = vector.load %arg4[%c0_11, %c0_12] : memref<1x64xf32, #tpu.memory_space<vmem>>, vector<1x64xf32>
    %27 = vector.broadcast %26 : vector<1x64xf32> to vector<8x64xf32>
    %28 = arith.mulf %25, %27 : vector<8x64xf32>
    %c0_13 = arith.constant 0 : index
    %c0_14 = arith.constant 0 : index
    %29 = vector.load %arg5[%c0_13, %c0_14] : memref<1x64xf32, #tpu.memory_space<vmem>>, vector<1x64xf32>
    %30 = vector.broadcast %29 : vector<1x64xf32> to vector<8x64xf32>
    %31 = arith.addf %28, %30 : vector<8x64xf32>
    %cst_15 = arith.constant 0.000000e+00 : f32
    %32 = vector.broadcast %cst_15 : f32 to vector<8x64xf32>
    %33 = arith.maximumf %31, %32 : vector<8x64xf32>
    %c0_16 = arith.constant 0 : index
    %c0_17 = arith.constant 0 : index
    %34 = vector.load %arg6[%c0_16, %c0_17] : memref<32x64xf32, #tpu.memory_space<vmem>>, vector<32x64xf32>
    %cst_18 = arith.constant dense<0.000000e+00> : vector<8x32xf32>
    %35 = tpu.matmul %33, %34, %cst_18 {dimension_numbers = #tpu.dot_dimension_numbers<[1], [1], [0], [0], [0, 0, 1, 0], [], []>} : vector<8x64xf32>, vector<32x64xf32>, vector<8x32xf32> -> vector<8x32xf32>
    %c0_19 = arith.constant 0 : index
    %c0_20 = arith.constant 0 : index
    %36 = vector.load %arg7[%c0_19, %c0_20] : memref<1x32xf32, #tpu.memory_space<vmem>>, vector<1x32xf32>
    %37 = vector.broadcast %36 : vector<1x32xf32> to vector<8x32xf32>
    %38 = arith.addf %35, %37 : vector<8x32xf32>
    %cst_21 = arith.constant dense<0.000000e+00> : vector<8xf32>
    %39 = vector.multi_reduction <add>, %38, %cst_21 [1] : vector<8x32xf32> to vector<8xf32>
    %40 = vector.shape_cast %39 : vector<8xf32> to vector<8x1xf32>
    %cst_22 = arith.constant 3.200000e+01 : f32
    %41 = vector.broadcast %cst_22 : f32 to vector<8x1xf32>
    %42 = arith.divf %40, %41 : vector<8x1xf32>
    %43 = arith.mulf %38, %38 : vector<8x32xf32>
    %cst_23 = arith.constant dense<0.000000e+00> : vector<8xf32>
    %44 = vector.multi_reduction <add>, %43, %cst_23 [1] : vector<8x32xf32> to vector<8xf32>
    %45 = vector.shape_cast %44 : vector<8xf32> to vector<8x1xf32>
    %cst_24 = arith.constant 3.200000e+01 : f32
    %46 = vector.broadcast %cst_24 : f32 to vector<8x1xf32>
    %47 = arith.divf %45, %46 : vector<8x1xf32>
    %48 = arith.mulf %42, %42 : vector<8x1xf32>
    %49 = arith.subf %47, %48 : vector<8x1xf32>
    %cst_25 = arith.constant 0.000000e+00 : f32
    %50 = vector.broadcast %cst_25 : f32 to vector<8x1xf32>
    %51 = arith.maximumf %49, %50 : vector<8x1xf32>
    %52 = vector.broadcast %42 : vector<8x1xf32> to vector<8x32xf32>
    %53 = arith.subf %38, %52 : vector<8x32xf32>
    %cst_26 = arith.constant 9.99999974E-6 : f32
    %54 = vector.broadcast %cst_26 : f32 to vector<8x1xf32>
    %55 = arith.addf %51, %54 : vector<8x1xf32>
    %56 = math.rsqrt %55 : vector<8x1xf32>
    %57 = vector.broadcast %56 : vector<8x1xf32> to vector<8x32xf32>
    %58 = arith.mulf %53, %57 : vector<8x32xf32>
    %c0_27 = arith.constant 0 : index
    %c0_28 = arith.constant 0 : index
    %59 = vector.load %arg8[%c0_27, %c0_28] : memref<1x32xf32, #tpu.memory_space<vmem>>, vector<1x32xf32>
    %60 = vector.broadcast %59 : vector<1x32xf32> to vector<8x32xf32>
    %61 = arith.mulf %58, %60 : vector<8x32xf32>
    %c0_29 = arith.constant 0 : index
    %c0_30 = arith.constant 0 : index
    %62 = vector.load %arg9[%c0_29, %c0_30] : memref<1x32xf32, #tpu.memory_space<vmem>>, vector<1x32xf32>
    %63 = vector.broadcast %62 : vector<1x32xf32> to vector<8x32xf32>
    %64 = arith.addf %61, %63 : vector<8x32xf32>
    %cst_31 = arith.constant 0.000000e+00 : f32
    %65 = vector.broadcast %cst_31 : f32 to vector<8x32xf32>
    %66 = arith.maximumf %64, %65 : vector<8x32xf32>
    %c0_32 = arith.constant 0 : index
    %c0_33 = arith.constant 0 : index
    %67 = vector.load %arg10[%c0_32, %c0_33] : memref<128x32xf32, #tpu.memory_space<vmem>>, vector<128x32xf32>
    %cst_34 = arith.constant dense<0.000000e+00> : vector<8x128xf32>
    %68 = tpu.matmul %66, %67, %cst_34 {dimension_numbers = #tpu.dot_dimension_numbers<[1], [1], [0], [0], [0, 0, 1, 0], [], []>} : vector<8x32xf32>, vector<128x32xf32>, vector<8x128xf32> -> vector<8x128xf32>
    %c0_35 = arith.constant 0 : index
    %c0_36 = arith.constant 0 : index
    %69 = vector.load %arg11[%c0_35, %c0_36] : memref<1x128xf32, #tpu.memory_space<vmem>>, vector<1x128xf32>
    %70 = vector.broadcast %69 : vector<1x128xf32> to vector<8x128xf32>
    %71 = arith.addf %68, %70 : vector<8x128xf32>
    %c0_37 = arith.constant 0 : index
    %c0_38 = arith.constant 0 : index
    %72 = vector.load %arg12[%c0_37, %c0_38] : memref<8x128xf32, #tpu.memory_space<vmem>>, vector<8x128xf32>
    tpu.vector_store %arg12[%c0_37, %c0_38], %71 {strides = array<i32>} : memref<8x128xf32, #tpu.memory_space<vmem>>, vector<8x128xf32>,
    return
  }
  func.func @transform_0(%arg0: i32) -> (i32, i32) {
    %c0_i32 = arith.constant 0 : i32
    %c0_i32_0 = arith.constant 0 : i32
    return %arg0, %c0_i32 : i32, i32
  }
  func.func @transform_1(%arg0: i32) -> (i32, i32) {
    %c0_i32 = arith.constant 0 : i32
    %c0_i32_0 = arith.constant 0 : i32
    %c0_i32_1 = arith.constant 0 : i32
    return %c0_i32, %c0_i32_0 : i32, i32
  }
  func.func @transform_2(%arg0: i32) -> (i32, i32) {
    %c0_i32 = arith.constant 0 : i32
    %c0_i32_0 = arith.constant 0 : i32
    %c0_i32_1 = arith.constant 0 : i32
    return %c0_i32, %c0_i32_0 : i32, i32
  }
  func.func @transform_3(%arg0: i32) -> (i32, i32) {
    %c0_i32 = arith.constant 0 : i32
    %c0_i32_0 = arith.constant 0 : i32
    %c0_i32_1 = arith.constant 0 : i32
    return %c0_i32, %c0_i32_0 : i32, i32
  }
  func.func @transform_4(%arg0: i32) -> (i32, i32) {
    %c0_i32 = arith.constant 0 : i32
    %c0_i32_0 = arith.constant 0 : i32
    %c0_i32_1 = arith.constant 0 : i32
    return %c0_i32, %c0_i32_0 : i32, i32
  }
  func.func @transform_5(%arg0: i32) -> (i32, i32) {
    %c0_i32 = arith.constant 0 : i32
    %c0_i32_0 = arith.constant 0 : i32
    %c0_i32_1 = arith.constant 0 : i32
    return %c0_i32, %c0_i32_0 : i32, i32
  }
  func.func @transform_6(%arg0: i32) -> (i32, i32) {
    %c0_i32 = arith.constant 0 : i32
    %c0_i32_0 = arith.constant 0 : i32
    %c0_i32_1 = arith.constant 0 : i32
    return %c0_i32, %c0_i32_0 : i32, i32
  }
  func.func @transform_7(%arg0: i32) -> (i32, i32) {
    %c0_i32 = arith.constant 0 : i32
    %c0_i32_0 = arith.constant 0 : i32
    %c0_i32_1 = arith.constant 0 : i32
    return %c0_i32, %c0_i32_0 : i32, i32
  }
  func.func @transform_8(%arg0: i32) -> (i32, i32) {
    %c0_i32 = arith.constant 0 : i32
    %c0_i32_0 = arith.constant 0 : i32
    %c0_i32_1 = arith.constant 0 : i32
    return %c0_i32, %c0_i32_0 : i32, i32
  }
  func.func @transform_9(%arg0: i32) -> (i32, i32) {
    %c0_i32 = arith.constant 0 : i32
    %c0_i32_0 = arith.constant 0 : i32
    %c0_i32_1 = arith.constant 0 : i32
    return %c0_i32, %c0_i32_0 : i32, i32
  }
  func.func @transform_10(%arg0: i32) -> (i32, i32) {
    %c0_i32 = arith.constant 0 : i32
    %c0_i32_0 = arith.constant 0 : i32
    %c0_i32_1 = arith.constant 0 : i32
    return %c0_i32, %c0_i32_0 : i32, i32
  }
  func.func @transform_11(%arg0: i32) -> (i32, i32) {
    %c0_i32 = arith.constant 0 : i32
    %c0_i32_0 = arith.constant 0 : i32
    return %arg0, %c0_i32 : i32, i32
  }
}

</mosaic_0001>

<llo_original>
// kernel: tpu_custom_call.1
$region0: #{tpu_custom_call.1}
  #allocation0 [shape = 'u32[]', space=smem, size = 0x4, offset = 0x4, fixed_abs, tag = 'smem constant byte address 0x4 - core index']
  #allocation1 [shape = 'u32[144,128]{1,0:T(1,128)}', space=vmem, size = 0x12000, scoped, tag = 'internal scratch']
  %s0 = inlined_call_operand.vmem [shape: f32[8,32], index: 0, kind: input, shape index: {}]
  %s1 = inlined_call_operand.vmem [shape: f32[64,32], index: 1, kind: input, shape index: {}]
  %s2 = inlined_call_operand.vmem [shape: f32[1,64], index: 2, kind: input, shape index: {}]
  %s3 = inlined_call_operand.vmem [shape: f32[1,64], index: 3, kind: input, shape index: {}]
  %s4 = inlined_call_operand.vmem [shape: f32[1,64], index: 4, kind: input, shape index: {}]
  %s5 = inlined_call_operand.vmem [shape: f32[32,64], index: 5, kind: input, shape index: {}]
  %s6 = inlined_call_operand.vmem [shape: f32[1,32], index: 6, kind: input, shape index: {}]
  %s7 = inlined_call_operand.vmem [shape: f32[1,32], index: 7, kind: input, shape index: {}]
  %s8 = inlined_call_operand.vmem [shape: f32[1,32], index: 8, kind: input, shape index: {}]
  %s9 = inlined_call_operand.vmem [shape: f32[128,32], index: 9, kind: input, shape index: {}]
  %s10 = inlined_call_operand.vmem [shape: f32[1,128], index: 10, kind: input, shape index: {}]
  %s11 = inlined_call_operand.hbm [shape: f32[8,128], index: 11, kind: output, shape index: {}]
  %s12 = sld [smem:[#allocation0]]
  $region54: #{tpu_custom_call.1} parent=0
    _
  %s14 = ssub.s32 1, %s12
  %s15 = scalar_select 0, %s14, %s12
  $region1: #{tpu_custom_call.1} parent=0
    #allocation2 [shape = 'u8[4096]{0}', space=vmem, size = 0x1000, scoped, tag = 'output window, operand 0, single buffered']
    #allocation3 [shape = 's32[1]{0}', space=sflag, size = 0x4, scoped, tag = 'scoped memory for tpu_custom_call.1']
    %16 = vsyncpa [#allocation3], 0
    // Predicated region
    $region2: #{tpu_custom_call.1} parent=1 // pred_check
      _
    $region3: #{tpu_custom_call.1} parent=1 // pred_check_branch
      %18 = sbr.rel (0) target = $region5
    $region4: #{tpu_custom_call.1} parent=1 // pred_region
      _
    $region5: #{tpu_custom_call.1} parent=1 // pred_fallthru
      _
    // Predicated region
    $region6: #{tpu_custom_call.1} parent=1 // pred_check
      _
    $region7: #{tpu_custom_call.1} parent=1 // pred_check_branch
      %20 = sbr.rel (0) target = $region9
    $region8: #{tpu_custom_call.1} parent=1 // pred_region
      _
    $region9: #{tpu_custom_call.1} parent=1 // pred_fallthru
      _
    // Predicated region
    $region10: #{tpu_custom_call.1} parent=1 // pred_check
      _
    $region11: #{tpu_custom_call.1} parent=1 // pred_check_branch
      %22 = sbr.rel (0) target = $region13
    $region12: #{tpu_custom_call.1} parent=1 // pred_region
      _
    $region13: #{tpu_custom_call.1} parent=1 // pred_fallthru
      _
    // Predicated region
    $region14: #{tpu_custom_call.1} parent=1 // pred_check
      _
    $region15: #{tpu_custom_call.1} parent=1 // pred_check_branch
      %24 = sbr.rel (0) target = $region17
    $region16: #{tpu_custom_call.1} parent=1 // pred_region
      _
    $region17: #{tpu_custom_call.1} parent=1 // pred_fallthru
      _
    // Predicated region
    $region18: #{tpu_custom_call.1} parent=1 // pred_check
      _
    $region19: #{tpu_custom_call.1} parent=1 // pred_check_branch
      %26 = sbr.rel (0) target = $region21
    $region20: #{tpu_custom_call.1} parent=1 // pred_region
      _
    $region21: #{tpu_custom_call.1} parent=1 // pred_fallthru
      _
    // Predicated region
    $region22: #{tpu_custom_call.1} parent=1 // pred_check
      _
    $region23: #{tpu_custom_call.1} parent=1 // pred_check_branch
      %28 = sbr.rel (0) target = $region25
    $region24: #{tpu_custom_call.1} parent=1 // pred_region
      _
    $region25: #{tpu_custom_call.1} parent=1 // pred_fallthru
      _
    // Predicated region
    $region26: #{tpu_custom_call.1} parent=1 // pred_check
      _
    $region27: #{tpu_custom_call.1} parent=1 // pred_check_branch
      %30 = sbr.rel (0) target = $region29
    $region28: #{tpu_custom_call.1} parent=1 // pred_region
      _
    $region29: #{tpu_custom_call.1} parent=1 // pred_fallthru
      _
    // Predicated region
    $region30: #{tpu_custom_call.1} parent=1 // pred_check
      _
    $region31: #{tpu_custom_call.1} parent=1 // pred_check_branch
      %32 = sbr.rel (0) target = $region33
    $region32: #{tpu_custom_call.1} parent=1 // pred_region
      _
    $region33: #{tpu_custom_call.1} parent=1 // pred_fallthru
      _
    // Predicated region
    $region34: #{tpu_custom_call.1} parent=1 // pred_check
      _
    $region35: #{tpu_custom_call.1} parent=1 // pred_check_branch
      %34 = sbr.rel (0) target = $region37
    $region36: #{tpu_custom_call.1} parent=1 // pred_region
      _
    $region37: #{tpu_custom_call.1} parent=1 // pred_fallthru
      _
    // Predicated region
    $region38: #{tpu_custom_call.1} parent=1 // pred_check
      _
    $region39: #{tpu_custom_call.1} parent=1 // pred_check_branch
      %36 = sbr.rel (0) target = $region41
    $region40: #{tpu_custom_call.1} parent=1 // pred_region
      _
    $region41: #{tpu_custom_call.1} parent=1 // pred_fallthru
      _
    // Predicated region
    $region42: #{tpu_custom_call.1} parent=1 // pred_check
      _
    $region43: #{tpu_custom_call.1} parent=1 // pred_check_branch
      %38 = sbr.rel (0) target = $region45
    $region44: #{tpu_custom_call.1} parent=1 // pred_region
      _
    $region45: #{tpu_custom_call.1} parent=1 // pred_fallthru
      _
    %v39 = vld [vmem:[%s0] sm:$0xff]
    %v40 = vld [vmem:[%s1] sm:$0xff]
    %v41 = vld [vmem:[%s1 + $0x8] sm:$0xff]
    %v42 = vld [vmem:[%s1 + $0x10] sm:$0xff]
    %v43 = vld [vmem:[%s1 + $0x18] sm:$0xff]
    %v44 = vld [vmem:[%s1 + $0x20] sm:$0xff]
    %v45 = vld [vmem:[%s1 + $0x28] sm:$0xff]
    %v46 = vld [vmem:[%s1 + $0x30] sm:$0xff]
    %v47 = vld [vmem:[%s1 + $0x38] sm:$0xff]
    %v48 = vld [vmem:[%s2] sm:$0x1]
    %v50 = vlaneseq
    %v51 = vshrl.u32 %v50, 7
    %v52 = vsub.s32 0, %v51
    %v53 = vrot.slane %v48, %v52
    %vm55 = vcmask 261120
    %v57 = vsel %vm55, %v39, 0
    %v60 = vsel %vm55, %v40, 0
    %v63 = vsel %vm55, %v41, 0
    %v66 = vsel %vm55, %v42, 0
    %v69 = vsel %vm55, %v43, 0
    %v72 = vsel %vm55, %v44, 0
    %v75 = vsel %vm55, %v45, 0
    %v78 = vsel %vm55, %v46, 0
    %v81 = vsel %vm55, %v47, 0
    %83 = vmatprep.subr.mxu0 0.0
    %84 = vmatpush1.xpose.msra.mxu0 0.0
    %85 = vmatprep.subr.mxu0 0.0
    %86 = vmatpush1.xpose.msra.mxu0 0.0
    %87 = vmatprep.subr.mxu0 0.0
    %88 = vmatpush1.xpose.msra.mxu0 0.0
    %89 = vmatprep.subr.mxu0 0.0
    %90 = vmatpush1.xpose.msra.mxu0 0.0
    %91 = vmatprep.subr.mxu0 0.0
    %92 = vmatpush1.xpose.msra.mxu0 0.0
    %93 = vmatprep.subr.mxu0 0.0
    %94 = vmatpush1.xpose.msra.mxu0 0.0
    %95 = vmatprep.subr.mxu0 0.0
    %96 = vmatpush1.xpose.msra.mxu0 0.0
    %97 = vmatprep.subr.mxu0 0.0
    %98 = vmatpush1.xpose.msra.mxu0 0.0
    %99 = vmatprep.subr.mxu0 0.0
    %100 = vmatpush1.xpose.msra.mxu0 %v81
    %101 = vmatprep.subr.mxu0 0.0
    %102 = vmatpush1.xpose.msra.mxu0 %v78
    %103 = vmatprep.subr.mxu0 0.0
    %104 = vmatpush1.xpose.msra.mxu0 %v75
    %105 = vmatprep.subr.mxu0 0.0
    %106 = vmatpush1.xpose.msra.mxu0 %v72
    %107 = vmatprep.subr.mxu0 0.0
    %108 = vmatpush1.xpose.msra.mxu0 %v69
    %109 = vmatprep.subr.mxu0 0.0
    %110 = vmatpush1.xpose.msra.mxu0 %v66
    %111 = vmatprep.subr.mxu0 0.0
    %112 = vmatpush1.xpose.msra.mxu0 %v63
    %113 = vmatprep.subr.mxu0 0.0
    %114 = vmatpush1.xpose.msra.mxu0 %v60
    %115 = vmatprep.subr.mxu0 0.0
    %116 = vmatpush2.xpose.msra.mxu0 0.0
    %117 = vmatprep.subr.mxu0 0.0
    %118 = vmatpush2.xpose.msra.mxu0 0.0
    %119 = vmatprep.subr.mxu0 0.0
    %120 = vmatpush2.xpose.msra.mxu0 0.0
    %121 = vmatprep.subr.mxu0 0.0
    %122 = vmatpush2.xpose.msra.mxu0 0.0
    %123 = vmatprep.subr.mxu0 0.0
    %124 = vmatpush2.xpose.msra.mxu0 0.0
    %125 = vmatprep.subr.mxu0 0.0
    %126 = vmatpush2.xpose.msra.mxu0 0.0
    %127 = vmatprep.subr.mxu0 0.0
    %128 = vmatpush2.xpose.msra.mxu0 0.0
    %129 = vmatprep.subr.mxu0 0.0
    %130 = vmatpush2.xpose.msra.mxu0 0.0
    %131 = vmatprep.subr.mxu0 0.0
    %132 = vmatpush2.xpose.msra.mxu0 0.0
    %133 = vmatprep.subr.mxu0 0.0
    %134 = vmatpush2.xpose.msra.mxu0 0.0
    %135 = vmatprep.subr.mxu0 0.0
    %136 = vmatpush2.xpose.msra.mxu0 0.0
    %137 = vmatprep.subr.mxu0 0.0
    %138 = vmatpush2.xpose.msra.mxu0 0.0
    %139 = vmatprep.subr.mxu0 0.0
    %140 = vmatpush2.xpose.msra.mxu0 0.0
    %141 = vmatprep.subr.mxu0 0.0
    %142 = vmatpush2.xpose.msra.mxu0 0.0
    %143 = vmatprep.subr.mxu0 0.0
    %144 = vmatpush2.xpose.msra.mxu0 0.0
    %145 = vmatprep.subr.mxu0 0.0
    %146 = vmatpush2.xpose.msra.mxu0 0.0
    %147 = vmatprep.mubr.f32.mxu0 0.0
    %148 = vmatmul.mubr.f32.gmra.mxu0 %v57
    %v149 = vpop.f32.mrf.mxu0
    %v150 = vadd.f32 %v53, %v149
    %v151 = vpop.f32.mrf.mxu0
    %152 = vdwg.mxu0
    %vm153 = vcmask 523264
    %v154 = vsel %vm153, %v150, 0.0
    %155 = vadd.xlane.f32.xlu0 %v154
    %v156 = vpop.xlane.xlu0 %155
    %v157 = vrcp.pop 64.0
    %v158 = vmul.f32 %v156, %v157
    %v159 = vmul.f32 %v150, %v150
    %v160 = vsel %vm153, %v159, 0.0
    %161 = vadd.xlane.f32.xlu0 %v160
    %v162 = vpop.xlane.xlu0 %161
    %v163 = vmul.f32 %v162, %v157
    %v164 = vmul.f32 %v158, %v158
    %v165 = vsub.f32 %v163, %v164
    %v166 = vmax.f32 %v165, 0.0
    %v167 = vsub.f32 %v150, %v158
    %v168 = vadd.f32 %v166, 1e-05
    %v169 = vrsqrt.pop %v168
    %v170 = vmul.f32 %v167, %v169
    %v171 = vld [vmem:[%s3] sm:$0x1]
    %v173 = vlaneseq
    %v174 = vshrl.u32 %v173, 7
    %v175 = vsub.s32 0, %v174
    %v176 = vrot.slane %v171, %v175
    %v178 = vmul.f32 %v170, %v176
    %v179 = vld [vmem:[%s4] sm:$0x1]
    %v181 = vlaneseq
    %v182 = vshrl.u32 %v181, 7
    %v183 = vsub.s32 0, %v182
    %v184 = vrot.slane %v179, %v183
    %v186 = vadd.f32 %v178, %v184
    %v187 = vmax.f32 %v186, 0.0
    %v188 = vld [vmem:[%s5] sm:$0xff]
    %v189 = vld [vmem:[%s5 + $0x8] sm:$0xff]
    %v190 = vld [vmem:[%s5 + $0x10] sm:$0xff]
    %v191 = vld [vmem:[%s5 + $0x18] sm:$0xff]
    %v192 = vld [vmem:[%s6] sm:$0x1]
    %v194 = vlaneseq
    %v195 = vshrl.u32 %v194, 7
    %v196 = vsub.s32 0, %v195
    %v197 = vrot.slane %v192, %v196
    %v200 = vsel %vm153, %v187, 0
    %v203 = vsel %vm153, %v188, 0
    %v206 = vsel %vm153, %v189, 0
    %v209 = vsel %vm153, %v190, 0
    %v212 = vsel %vm153, %v191, 0
    %214 = vmatprep.subr.mxu0 0.0
    %215 = vmatpush1.xpose.msra.mxu0 0.0
    %216 = vmatprep.subr.mxu0 0.0
    %217 = vmatpush1.xpose.msra.mxu0 0.0
    %218 = vmatprep.subr.mxu0 0.0
    %219 = vmatpush1.xpose.msra.mxu0 0.0
    %220 = vmatprep.subr.mxu0 0.0
    %221 = vmatpush1.xpose.msra.mxu0 0.0
    %222 = vmatprep.subr.mxu0 0.0
    %223 = vmatpush1.xpose.msra.mxu0 0.0
    %224 = vmatprep.subr.mxu0 0.0
    %225 = vmatpush1.xpose.msra.mxu0 0.0
    %226 = vmatprep.subr.mxu0 0.0
    %227 = vmatpush1.xpose.msra.mxu0 0.0
    %228 = vmatprep.subr.mxu0 0.0
    %229 = vmatpush1.xpose.msra.mxu0 0.0
    %230 = vmatprep.subr.mxu0 0.0
    %231 = vmatpush1.xpose.msra.mxu0 0.0
    %232 = vmatprep.subr.mxu0 0.0
    %233 = vmatpush1.xpose.msra.mxu0 0.0
    %234 = vmatprep.subr.mxu0 0.0
    %235 = vmatpush1.xpose.msra.mxu0 0.0
    %236 = vmatprep.subr.mxu0 0.0
    %237 = vmatpush1.xpose.msra.mxu0 0.0
    %238 = vmatprep.subr.mxu0 0.0
    %239 = vmatpush1.xpose.msra.mxu0 %v212
    %240 = vmatprep.subr.mxu0 0.0
    %241 = vmatpush1.xpose.msra.mxu0 %v209
    %242 = vmatprep.subr.mxu0 0.0
    %243 = vmatpush1.xpose.msra.mxu0 %v206
    %244 = vmatprep.subr.mxu0 0.0
    %245 = vmatpush1.xpose.msra.mxu0 %v203
    %246 = vmatprep.subr.mxu0 0.0
    %247 = vmatpush2.xpose.msra.mxu0 0.0
    %248 = vmatprep.subr.mxu0 0.0
    %249 = vmatpush2.xpose.msra.mxu0 0.0
    %250 = vmatprep.subr.mxu0 0.0
    %251 = vmatpush2.xpose.msra.mxu0 0.0
    %252 = vmatprep.subr.mxu0 0.0
    %253 = vmatpush2.xpose.msra.mxu0 0.0
    %254 = vmatprep.subr.mxu0 0.0
    %255 = vmatpush2.xpose.msra.mxu0 0.0
    %256 = vmatprep.subr.mxu0 0.0
    %257 = vmatpush2.xpose.msra.mxu0 0.0
    %258 = vmatprep.subr.mxu0 0.0
    %259 = vmatpush2.xpose.msra.mxu0 0.0
    %260 = vmatprep.subr.mxu0 0.0
    %261 = vmatpush2.xpose.msra.mxu0 0.0
    %262 = vmatprep.subr.mxu0 0.0
    %263 = vmatpush2.xpose.msra.mxu0 0.0
    %264 = vmatprep.subr.mxu0 0.0
    %265 = vmatpush2.xpose.msra.mxu0 0.0
    %266 = vmatprep.subr.mxu0 0.0
    %267 = vmatpush2.xpose.msra.mxu0 0.0
    %268 = vmatprep.subr.mxu0 0.0
    %269 = vmatpush2.xpose.msra.mxu0 0.0
    %270 = vmatprep.subr.mxu0 0.0
    %271 = vmatpush2.xpose.msra.mxu0 0.0
    %272 = vmatprep.subr.mxu0 0.0
    %273 = vmatpush2.xpose.msra.mxu0 0.0
    %274 = vmatprep.subr.mxu0 0.0
    %275 = vmatpush2.xpose.msra.mxu0 0.0
    %276 = vmatprep.subr.mxu0 0.0
    %277 = vmatpush2.xpose.msra.mxu0 0.0
    %278 = vmatprep.mubr.f32.mxu0 0.0
    %279 = vmatmul.mubr.f32.gmra.mxu0 %v200
    %v280 = vpop.f32.mrf.mxu0
    %v281 = vadd.f32 %v197, %v280
    %v282 = vpop.f32.mrf.mxu0
    %283 = vdwg.mxu0
    %v284 = vsel %vm55, %v281, 0.0
    %285 = vadd.xlane.f32.xlu0 %v284
    %v286 = vpop.xlane.xlu0 %285
    %v287 = vrcp.pop 32.0
    %v288 = vmul.f32 %v286, %v287
    %v289 = vmul.f32 %v281, %v281
    %v290 = vsel %vm55, %v289, 0.0
    %291 = vadd.xlane.f32.xlu0 %v290
    %v292 = vpop.xlane.xlu0 %291
    %v293 = vmul.f32 %v292, %v287
    %v294 = vmul.f32 %v288, %v288
    %v295 = vsub.f32 %v293, %v294
    %v296 = vmax.f32 %v295, 0.0
    %v297 = vsub.f32 %v281, %v288
    %v298 = vadd.f32 %v296, 1e-05
    %v299 = vrsqrt.pop %v298
    %v300 = vmul.f32 %v297, %v299
    %v301 = vld [vmem:[%s7] sm:$0x1]
    %v303 = vlaneseq
    %v304 = vshrl.u32 %v303, 7
    %v305 = vsub.s32 0, %v304
    %v306 = vrot.slane %v301, %v305
    %v308 = vmul.f32 %v300, %v306
    %v309 = vld [vmem:[%s8] sm:$0x1]
    %v311 = vlaneseq
    %v312 = vshrl.u32 %v311, 7
    %v313 = vsub.s32 0, %v312
    %v314 = vrot.slane %v309, %v313
    %v316 = vadd.f32 %v308, %v314
    %v317 = vmax.f32 %v316, 0.0
    %v318 = vld [vmem:[%s9] sm:$0xff]
    %v319 = vld [vmem:[%s9 + $0x8] sm:$0xff]
    %v320 = vld [vmem:[%s9 + $0x10] sm:$0xff]
    %v321 = vld [vmem:[%s9 + $0x18] sm:$0xff]
    %v322 = vld [vmem:[%s9 + $0x20] sm:$0xff]
    %v323 = vld [vmem:[%s9 + $0x28] sm:$0xff]
    %v324 = vld [vmem:[%s9 + $0x30] sm:$0xff]
    %v325 = vld [vmem:[%s9 + $0x38] sm:$0xff]
    %v326 = vld [vmem:[%s9 + $0x40] sm:$0xff]
    %v327 = vld [vmem:[%s9 + $0x48] sm:$0xff]
    %v328 = vld [vmem:[%s9 + $0x50] sm:$0xff]
    %v329 = vld [vmem:[%s9 + $0x58] sm:$0xff]
    %v330 = vld [vmem:[%s9 + $0x60] sm:$0xff]
    %v331 = vld [vmem:[%s9 + $0x68] sm:$0xff]
    %v332 = vld [vmem:[%s9 + $0x70] sm:$0xff]
    %v333 = vld [vmem:[%s9 + $0x78] sm:$0xff]
    %v334 = vld [vmem:[%s10] sm:$0x1]
    %v336 = vlaneseq
    %v337 = vshrl.u32 %v336, 7
    %v338 = vsub.s32 0, %v337
    %v339 = vrot.slane %v334, %v338
    %v342 = vsel %vm55, %v317, 0
    %v345 = vsel %vm55, %v318, 0
    %v348 = vsel %vm55, %v319, 0
    %v351 = vsel %vm55, %v320, 0
    %v354 = vsel %vm55, %v321, 0
    %v357 = vsel %vm55, %v322, 0
    %v360 = vsel %vm55, %v323, 0
    %v363 = vsel %vm55, %v324, 0
    %v366 = vsel %vm55, %v325, 0
    %v369 = vsel %vm55, %v326, 0
    %v372 = vsel %vm55, %v327, 0
    %v375 = vsel %vm55, %v328, 0
    %v378 = vsel %vm55, %v329, 0
    %v381 = vsel %vm55, %v330, 0
    %v384 = vsel %vm55, %v331, 0
    %v387 = vsel %vm55, %v332, 0
    %v390 = vsel %vm55, %v333, 0
    %392 = vmatprep.subr.mxu0 0.0
    %393 = vmatpush1.xpose.msra.mxu0 %v390
    %394 = vmatprep.subr.mxu0 0.0
    %395 = vmatpush1.xpose.msra.mxu0 %v387
    %396 = vmatprep.subr.mxu0 0.0
    %397 = vmatpush1.xpose.msra.mxu0 %v384
    %398 = vmatprep.subr.mxu0 0.0
    %399 = vmatpush1.xpose.msra.mxu0 %v381
    %400 = vmatprep.subr.mxu0 0.0
    %401 = vmatpush1.xpose.msra.mxu0 %v378
    %402 = vmatprep.subr.mxu0 0.0
    %403 = vmatpush1.xpose.msra.mxu0 %v375
    %404 = vmatprep.subr.mxu0 0.0
    %405 = vmatpush1.xpose.msra.mxu0 %v372
    %406 = vmatprep.subr.mxu0 0.0
    %407 = vmatpush1.xpose.msra.mxu0 %v369
    %408 = vmatprep.subr.mxu0 0.0
    %409 = vmatpush1.xpose.msra.mxu0 %v366
    %410 = vmatprep.subr.mxu0 0.0
    %411 = vmatpush1.xpose.msra.mxu0 %v363
    %412 = vmatprep.subr.mxu0 0.0
    %413 = vmatpush1.xpose.msra.mxu0 %v360
    %414 = vmatprep.subr.mxu0 0.0
    %415 = vmatpush1.xpose.msra.mxu0 %v357
    %416 = vmatprep.subr.mxu0 0.0
    %417 = vmatpush1.xpose.msra.mxu0 %v354
    %418 = vmatprep.subr.mxu0 0.0
    %419 = vmatpush1.xpose.msra.mxu0 %v351
    %420 = vmatprep.subr.mxu0 0.0
    %421 = vmatpush1.xpose.msra.mxu0 %v348
    %422 = vmatprep.subr.mxu0 0.0
    %423 = vmatpush1.xpose.msra.mxu0 %v345
    %424 = vmatprep.subr.mxu0 0.0
    %425 = vmatpush2.xpose.msra.mxu0 0.0
    %426 = vmatprep.subr.mxu0 0.0
    %427 = vmatpush2.xpose.msra.mxu0 0.0
    %428 = vmatprep.subr.mxu0 0.0
    %429 = vmatpush2.xpose.msra.mxu0 0.0
    %430 = vmatprep.subr.mxu0 0.0
    %431 = vmatpush2.xpose.msra.mxu0 0.0
    %432 = vmatprep.subr.mxu0 0.0
    %433 = vmatpush2.xpose.msra.mxu0 0.0
    %434 = vmatprep.subr.mxu0 0.0
    %435 = vmatpush2.xpose.msra.mxu0 0.0
    %436 = vmatprep.subr.mxu0 0.0
    %437 = vmatpush2.xpose.msra.mxu0 0.0
    %438 = vmatprep.subr.mxu0 0.0
    %439 = vmatpush2.xpose.msra.mxu0 0.0
    %440 = vmatprep.subr.mxu0 0.0
    %441 = vmatpush2.xpose.msra.mxu0 0.0
    %442 = vmatprep.subr.mxu0 0.0
    %443 = vmatpush2.xpose.msra.mxu0 0.0
    %444 = vmatprep.subr.mxu0 0.0
    %445 = vmatpush2.xpose.msra.mxu0 0.0
    %446 = vmatprep.subr.mxu0 0.0
    %447 = vmatpush2.xpose.msra.mxu0 0.0
    %448 = vmatprep.subr.mxu0 0.0
    %449 = vmatpush2.xpose.msra.mxu0 0.0
    %450 = vmatprep.subr.mxu0 0.0
    %451 = vmatpush2.xpose.msra.mxu0 0.0
    %452 = vmatprep.subr.mxu0 0.0
    %453 = vmatpush2.xpose.msra.mxu0 0.0
    %454 = vmatprep.subr.mxu0 0.0
    %455 = vmatpush2.xpose.msra.mxu0 0.0
    %456 = vmatprep.mubr.f32.mxu0 0.0
    %457 = vmatmul.mubr.f32.gmra.mxu0 %v342
    %v458 = vpop.f32.mrf.mxu0
    %v459 = vadd.f32 %v339, %v458
    %v460 = vpop.f32.mrf.mxu0
    %461 = vdwg.mxu0
    %462 = vst [vmem:[#allocation2] sm:$0xff] %v459
    // Predicated region
    $region46: #{tpu_custom_call.1} parent=1 // pred_check
      _
    $region47: #{tpu_custom_call.1} parent=1 // pred_check_branch
      %464 = sbr.rel (0) target = $region49
    $region48: #{tpu_custom_call.1} parent=1 // pred_region
      %s466 = ssub.s32 128, 128
      %467 = vsyncadd [#allocation3], %s466
      %s469 = sshll.u32 [#allocation2], 4
      %s470 = int_to_ptr.vmem [resolvable:$true] %s469
      %472 = dma.vmem_to_hbm [thread:$0]  %s470, 128, %s11, [#allocation3]
    $region49: #{tpu_custom_call.1} parent=1 // pred_fallthru
      _
    // Predicated region
    $region50: #{tpu_custom_call.1} parent=1 // pred_check
      _
    $region51: #{tpu_custom_call.1} parent=1 // pred_check_branch
      %474 = sbr.rel (0) target = $region53
    $region52: #{tpu_custom_call.1} parent=1 // pred_region
      %475 = dma.done [#allocation3], 128
    $region53: #{tpu_custom_call.1} parent=1 // pred_fallthru
      _
    %476 = vsyncpa [#allocation3], 1

// kernel: tpu_custom_call.1
$region0: #{tpu_custom_call.1}
  #allocation0 [shape = 'u32[]', space=smem, size = 0x4, offset = 0x4, fixed_abs, tag = 'smem constant byte address 0x4 - core index']
  #allocation1 [shape = 'u32[144,128]{1,0:T(1,128)}', space=vmem, size = 0x12000, scoped, tag = 'internal scratch']
  %s0 = inlined_call_operand.vmem [shape: f32[8,32], index: 0, kind: input, shape index: {}]
  %s1 = inlined_call_operand.vmem [shape: f32[64,32], index: 1, kind: input, shape index: {}]
  %s2 = inlined_call_operand.vmem [shape: f32[1,64], index: 2, kind: input, shape index: {}]
  %s3 = inlined_call_operand.vmem [shape: f32[1,64], index: 3, kind: input, shape index: {}]
  %s4 = inlined_call_operand.vmem [shape: f32[1,64], index: 4, kind: input, shape index: {}]
  %s5 = inlined_call_operand.vmem [shape: f32[32,64], index: 5, kind: input, shape index: {}]
  %s6 = inlined_call_operand.vmem [shape: f32[1,32], index: 6, kind: input, shape index: {}]
  %s7 = inlined_call_operand.vmem [shape: f32[1,32], index: 7, kind: input, shape index: {}]
  %s8 = inlined_call_operand.vmem [shape: f32[1,32], index: 8, kind: input, shape index: {}]
  %s9 = inlined_call_operand.vmem [shape: f32[128,32], index: 9, kind: input, shape index: {}]
  %s10 = inlined_call_operand.vmem [shape: f32[1,128], index: 10, kind: input, shape index: {}]
  %s11 = inlined_call_operand.hbm [shape: f32[8,128], index: 11, kind: output, shape index: {}]
  %s12 = sld [smem:[#allocation0]]
  $region54: #{tpu_custom_call.1} parent=0
    _
  %s14 = ssub.s32 1, %s12
  %s15 = scalar_select 0, %s14, %s12
  $region1: #{tpu_custom_call.1} parent=0
    #allocation2 [shape = 'u8[4096]{0}', space=vmem, size = 0x1000, scoped, tag = 'output window, operand 0, single buffered']
    #allocation3 [shape = 's32[1]{0}', space=sflag, size = 0x4, scoped, tag = 'scoped memory for tpu_custom_call.1']
    %16 = vsyncpa [#allocation3], 0
    // Predicated region
    $region2: #{tpu_custom_call.1} parent=1 // pred_check
      _
    $region3: #{tpu_custom_call.1} parent=1 // pred_check_branch
      %18 = sbr.rel (0) target = $region5
    $region4: #{tpu_custom_call.1} parent=1 // pred_region
      _
    $region5: #{tpu_custom_call.1} parent=1 // pred_fallthru
      _
    // Predicated region
    $region6: #{tpu_custom_call.1} parent=1 // pred_check
      _
    $region7: #{tpu_custom_call.1} parent=1 // pred_check_branch
      %20 = sbr.rel (0) target = $region9
    $region8: #{tpu_custom_call.1} parent=1 // pred_region
      _
    $region9: #{tpu_custom_call.1} parent=1 // pred_fallthru
      _
    // Predicated region
    $region10: #{tpu_custom_call.1} parent=1 // pred_check
      _
    $region11: #{tpu_custom_call.1} parent=1 // pred_check_branch
      %22 = sbr.rel (0) target = $region13
    $region12: #{tpu_custom_call.1} parent=1 // pred_region
      _
    $region13: #{tpu_custom_call.1} parent=1 // pred_fallthru
      _
    // Predicated region
    $region14: #{tpu_custom_call.1} parent=1 // pred_check
      _
    $region15: #{tpu_custom_call.1} parent=1 // pred_check_branch
      %24 = sbr.rel (0) target = $region17
    $region16: #{tpu_custom_call.1} parent=1 // pred_region
      _
    $region17: #{tpu_custom_call.1} parent=1 // pred_fallthru
      _
    // Predicated region
    $region18: #{tpu_custom_call.1} parent=1 // pred_check
      _
    $region19: #{tpu_custom_call.1} parent=1 // pred_check_branch
      %26 = sbr.rel (0) target = $region21
    $region20: #{tpu_custom_call.1} parent=1 // pred_region
      _
    $region21: #{tpu_custom_call.1} parent=1 // pred_fallthru
      _
    // Predicated region
    $region22: #{tpu_custom_call.1} parent=1 // pred_check
      _
    $region23: #{tpu_custom_call.1} parent=1 // pred_check_branch
      %28 = sbr.rel (0) target = $region25
    $region24: #{tpu_custom_call.1} parent=1 // pred_region
      _
    $region25: #{tpu_custom_call.1} parent=1 // pred_fallthru
      _
    // Predicated region
    $region26: #{tpu_custom_call.1} parent=1 // pred_check
      _
    $region27: #{tpu_custom_call.1} parent=1 // pred_check_branch
      %30 = sbr.rel (0) target = $region29
    $region28: #{tpu_custom_call.1} parent=1 // pred_region
      _
    $region29: #{tpu_custom_call.1} parent=1 // pred_fallthru
      _
    // Predicated region
    $region30: #{tpu_custom_call.1} parent=1 // pred_check
      _
    $region31: #{tpu_custom_call.1} parent=1 // pred_check_branch
      %32 = sbr.rel (0) target = $region33
    $region32: #{tpu_custom_call.1} parent=1 // pred_region
      _
    $region33: #{tpu_custom_call.1} parent=1 // pred_fallthru
      _
    // Predicated region
    $region34: #{tpu_custom_call.1} parent=1 // pred_check
      _
    $region35: #{tpu_custom_call.1} parent=1 // pred_check_branch
      %34 = sbr.rel (0) target = $region37
    $region36: #{tpu_custom_call.1} parent=1 // pred_region
      _
    $region37: #{tpu_custom_call.1} parent=1 // pred_fallthru
      _
    // Predicated region
    $region38: #{tpu_custom_call.1} parent=1 // pred_check
      _
    $region39: #{tpu_custom_call.1} parent=1 // pred_check_branch
      %36 = sbr.rel (0) target = $region41
    $region40: #{tpu_custom_call.1} parent=1 // pred_region
      _
    $region41: #{tpu_custom_call.1} parent=1 // pred_fallthru
      _
    // Predicated region
    $region42: #{tpu_custom_call.1} parent=1 // pred_check
      _
    $region43: #{tpu_custom_call.1} parent=1 // pred_check_branch
      %38 = sbr.rel (0) target = $region45
    $region44: #{tpu_custom_call.1} parent=1 // pred_region
      _
    $region45: #{tpu_custom_call.1} parent=1 // pred_fallthru
      _
    %v39 = vld [vmem:[%s0] sm:$0xff]
    %v40 = vld [vmem:[%s1] sm:$0xff]
    %v41 = vld [vmem:[%s1 + $0x8] sm:$0xff]
    %v42 = vld [vmem:[%s1 + $0x10] sm:$0xff]
    %v43 = vld [vmem:[%s1 + $0x18] sm:$0xff]
    %v44 = vld [vmem:[%s1 + $0x20] sm:$0xff]
    %v45 = vld [vmem:[%s1 + $0x28] sm:$0xff]
    %v46 = vld [vmem:[%s1 + $0x30] sm:$0xff]
    %v47 = vld [vmem:[%s1 + $0x38] sm:$0xff]
    %v48 = vld [vmem:[%s2] sm:$0x1]
    %v50 = vlaneseq
    %v51 = vshrl.u32 %v50, 7
    %v52 = vsub.s32 0, %v51
    %v53 = vrot.slane %v48, %v52
    %vm55 = vcmask 261120
    %v57 = vsel %vm55, %v39, 0
    %v60 = vsel %vm55, %v40, 0
    %v63 = vsel %vm55, %v41, 0
    %v66 = vsel %vm55, %v42, 0
    %v69 = vsel %vm55, %v43, 0
    %v72 = vsel %vm55, %v44, 0
    %v75 = vsel %vm55, %v45, 0
    %v78 = vsel %vm55, %v46, 0
    %v81 = vsel %vm55, %v47, 0
    %83 = vmatprep.subr.mxu0 0.0
    %84 = vmatpush1.xpose.msra.mxu0 0.0
    %85 = vmatprep.subr.mxu0 0.0
    %86 = vmatpush1.xpose.msra.mxu0 0.0
    %87 = vmatprep.subr.mxu0 0.0
    %88 = vmatpush1.xpose.msra.mxu0 0.0
    %89 = vmatprep.subr.mxu0 0.0
    %90 = vmatpush1.xpose.msra.mxu0 0.0
    %91 = vmatprep.subr.mxu0 0.0
    %92 = vmatpush1.xpose.msra.mxu0 0.0
    %93 = vmatprep.subr.mxu0 0.0
    %94 = vmatpush1.xpose.msra.mxu0 0.0
    %95 = vmatprep.subr.mxu0 0.0
    %96 = vmatpush1.xpose.msra.mxu0 0.0
    %97 = vmatprep.subr.mxu0 0.0
    %98 = vmatpush1.xpose.msra.mxu0 0.0
    %99 = vmatprep.subr.mxu0 0.0
    %100 = vmatpush1.xpose.msra.mxu0 %v81
    %101 = vmatprep.subr.mxu0 0.0
    %102 = vmatpush1.xpose.msra.mxu0 %v78
    %103 = vmatprep.subr.mxu0 0.0
    %104 = vmatpush1.xpose.msra.mxu0 %v75
    %105 = vmatprep.subr.mxu0 0.0
    %106 = vmatpush1.xpose.msra.mxu0 %v72
    %107 = vmatprep.subr.mxu0 0.0
    %108 = vmatpush1.xpose.msra.mxu0 %v69
    %109 = vmatprep.subr.mxu0 0.0
    %110 = vmatpush1.xpose.msra.mxu0 %v66
    %111 = vmatprep.subr.mxu0 0.0
    %112 = vmatpush1.xpose.msra.mxu0 %v63
    %113 = vmatprep.subr.mxu0 0.0
    %114 = vmatpush1.xpose.msra.mxu0 %v60
    %115 = vmatprep.subr.mxu0 0.0
    %116 = vmatpush2.xpose.msra.mxu0 0.0
    %117 = vmatprep.subr.mxu0 0.0
    %118 = vmatpush2.xpose.msra.mxu0 0.0
    %119 = vmatprep.subr.mxu0 0.0
    %120 = vmatpush2.xpose.msra.mxu0 0.0
    %121 = vmatprep.subr.mxu0 0.0
    %122 = vmatpush2.xpose.msra.mxu0 0.0
    %123 = vmatprep.subr.mxu0 0.0
    %124 = vmatpush2.xpose.msra.mxu0 0.0
    %125 = vmatprep.subr.mxu0 0.0
    %126 = vmatpush2.xpose.msra.mxu0 0.0
    %127 = vmatprep.subr.mxu0 0.0
    %128 = vmatpush2.xpose.msra.mxu0 0.0
    %129 = vmatprep.subr.mxu0 0.0
    %130 = vmatpush2.xpose.msra.mxu0 0.0
    %131 = vmatprep.subr.mxu0 0.0
    %132 = vmatpush2.xpose.msra.mxu0 0.0
    %133 = vmatprep.subr.mxu0 0.0
    %134 = vmatpush2.xpose.msra.mxu0 0.0
    %135 = vmatprep.subr.mxu0 0.0
    %136 = vmatpush2.xpose.msra.mxu0 0.0
    %137 = vmatprep.subr.mxu0 0.0
    %138 = vmatpush2.xpose.msra.mxu0 0.0
    %139 = vmatprep.subr.mxu0 0.0
    %140 = vmatpush2.xpose.msra.mxu0 0.0
    %141 = vmatprep.subr.mxu0 0.0
    %142 = vmatpush2.xpose.msra.mxu0 0.0
    %143 = vmatprep.subr.mxu0 0.0
    %144 = vmatpush2.xpose.msra.mxu0 0.0
    %145 = vmatprep.subr.mxu0 0.0
    %146 = vmatpush2.xpose.msra.mxu0 0.0
    %147 = vmatprep.mubr.f32.mxu0 0.0
    %148 = vmatmul.mubr.f32.gmra.mxu0 %v57
    %v149 = vpop.f32.mrf.mxu0
    %v150 = vadd.f32 %v53, %v149
    %v151 = vpop.f32.mrf.mxu0
    %152 = vdwg.mxu0
    %vm153 = vcmask 523264
    %v154 = vsel %vm153, %v150, 0.0
    %155 = vadd.xlane.f32.xlu0 %v154
    %v156 = vpop.xlane.xlu0 %155
    %v157 = vrcp.pop 64.0
    %v158 = vmul.f32 %v156, %v157
    %v159 = vmul.f32 %v150, %v150
    %v160 = vsel %vm153, %v159, 0.0
    %161 = vadd.xlane.f32.xlu0 %v160
    %v162 = vpop.xlane.xlu0 %161
    %v163 = vmul.f32 %v162, %v157
    %v164 = vmul.f32 %v158, %v158
    %v165 = vsub.f32 %v163, %v164
    %v166 = vmax.f32 %v165, 0.0
    %v167 = vsub.f32 %v150, %v158
    %v168 = vadd.f32 %v166, 1e-05
    %v169 = vrsqrt.pop %v168
    %v170 = vmul.f32 %v167, %v169
    %v171 = vld [vmem:[%s3] sm:$0x1]
    %v173 = vlaneseq
    %v174 = vshrl.u32 %v173, 7
    %v175 = vsub.s32 0, %v174
    %v176 = vrot.slane %v171, %v175
    %v178 = vmul.f32 %v170, %v176
    %v179 = vld [vmem:[%s4] sm:$0x1]
    %v181 = vlaneseq
    %v182 = vshrl.u32 %v181, 7
    %v183 = vsub.s32 0, %v182
    %v184 = vrot.slane %v179, %v183
    %v186 = vadd.f32 %v178, %v184
    %v187 = vmax.f32 %v186, 0.0
    %v188 = vld [vmem:[%s5] sm:$0xff]
    %v189 = vld [vmem:[%s5 + $0x8] sm:$0xff]
    %v190 = vld [vmem:[%s5 + $0x10] sm:$0xff]
    %v191 = vld [vmem:[%s5 + $0x18] sm:$0xff]
    %v192 = vld [vmem:[%s6] sm:$0x1]
    %v194 = vlaneseq
    %v195 = vshrl.u32 %v194, 7
    %v196 = vsub.s32 0, %v195
    %v197 = vrot.slane %v192, %v196
    %v200 = vsel %vm153, %v187, 0
    %v203 = vsel %vm153, %v188, 0
    %v206 = vsel %vm153, %v189, 0
    %v209 = vsel %vm153, %v190, 0
    %v212 = vsel %vm153, %v191, 0
    %214 = vmatprep.subr.mxu0 0.0
    %215 = vmatpush1.xpose.msra.mxu0 0.0
    %216 = vmatprep.subr.mxu0 0.0
    %217 = vmatpush1.xpose.msra.mxu0 0.0
    %218 = vmatprep.subr.mxu0 0.0
    %219 = vmatpush1.xpose.msra.mxu0 0.0
    %220 = vmatprep.subr.mxu0 0.0
    %221 = vmatpush1.xpose.msra.mxu0 0.0
    %222 = vmatprep.subr.mxu0 0.0
    %223 = vmatpush1.xpose.msra.mxu0 0.0
    %224 = vmatprep.subr.mxu0 0.0
    %225 = vmatpush1.xpose.msra.mxu0 0.0
    %226 = vmatprep.subr.mxu0 0.0
    %227 = vmatpush1.xpose.msra.mxu0 0.0
    %228 = vmatprep.subr.mxu0 0.0
    %229 = vmatpush1.xpose.msra.mxu0 0.0
    %230 = vmatprep.subr.mxu0 0.0
    %231 = vmatpush1.xpose.msra.mxu0 0.0
    %232 = vmatprep.subr.mxu0 0.0
    %233 = vmatpush1.xpose.msra.mxu0 0.0
    %234 = vmatprep.subr.mxu0 0.0
    %235 = vmatpush1.xpose.msra.mxu0 0.0
    %236 = vmatprep.subr.mxu0 0.0
    %237 = vmatpush1.xpose.msra.mxu0 0.0
    %238 = vmatprep.subr.mxu0 0.0
    %239 = vmatpush1.xpose.msra.mxu0 %v212
    %240 = vmatprep.subr.mxu0 0.0
    %241 = vmatpush1.xpose.msra.mxu0 %v209
    %242 = vmatprep.subr.mxu0 0.0
    %243 = vmatpush1.xpose.msra.mxu0 %v206
    %244 = vmatprep.subr.mxu0 0.0
    %245 = vmatpush1.xpose.msra.mxu0 %v203
    %246 = vmatprep.subr.mxu0 0.0
    %247 = vmatpush2.xpose.msra.mxu0 0.0
    %248 = vmatprep.subr.mxu0 0.0
    %249 = vmatpush2.xpose.msra.mxu0 0.0
    %250 = vmatprep.subr.mxu0 0.0
    %251 = vmatpush2.xpose.msra.mxu0 0.0
    %252 = vmatprep.subr.mxu0 0.0
    %253 = vmatpush2.xpose.msra.mxu0 0.0
    %254 = vmatprep.subr.mxu0 0.0
    %255 = vmatpush2.xpose.msra.mxu0 0.0
    %256 = vmatprep.subr.mxu0 0.0
    %257 = vmatpush2.xpose.msra.mxu0 0.0
    %258 = vmatprep.subr.mxu0 0.0
    %259 = vmatpush2.xpose.msra.mxu0 0.0
    %260 = vmatprep.subr.mxu0 0.0
    %261 = vmatpush2.xpose.msra.mxu0 0.0
    %262 = vmatprep.subr.mxu0 0.0
    %263 = vmatpush2.xpose.msra.mxu0 0.0
    %264 = vmatprep.subr.mxu0 0.0
    %265 = vmatpush2.xpose.msra.mxu0 0.0
    %266 = vmatprep.subr.mxu0 0.0
    %267 = vmatpush2.xpose.msra.mxu0 0.0
    %268 = vmatprep.subr.mxu0 0.0
    %269 = vmatpush2.xpose.msra.mxu0 0.0
    %270 = vmatprep.subr.mxu0 0.0
    %271 = vmatpush2.xpose.msra.mxu0 0.0
    %272 = vmatprep.subr.mxu0 0.0
    %273 = vmatpush2.xpose.msra.mxu0 0.0
    %274 = vmatprep.subr.mxu0 0.0
    %275 = vmatpush2.xpose.msra.mxu0 0.0
    %276 = vmatprep.subr.mxu0 0.0
    %277 = vmatpush2.xpose.msra.mxu0 0.0
    %278 = vmatprep.mubr.f32.mxu0 0.0
    %279 = vmatmul.mubr.f32.gmra.mxu0 %v200
    %v280 = vpop.f32.mrf.mxu0
    %v281 = vadd.f32 %v197, %v280
    %v282 = vpop.f32.mrf.mxu0
    %283 = vdwg.mxu0
    %v284 = vsel %vm55, %v281, 0.0
    %285 = vadd.xlane.f32.xlu0 %v284
    %v286 = vpop.xlane.xlu0 %285
    %v287 = vrcp.pop 32.0
    %v288 = vmul.f32 %v286, %v287
    %v289 = vmul.f32 %v281, %v281
    %v290 = vsel %vm55, %v289, 0.0
    %291 = vadd.xlane.f32.xlu0 %v290
    %v292 = vpop.xlane.xlu0 %291
    %v293 = vmul.f32 %v292, %v287
    %v294 = vmul.f32 %v288, %v288
    %v295 = vsub.f32 %v293, %v294
    %v296 = vmax.f32 %v295, 0.0
    %v297 = vsub.f32 %v281, %v288
    %v298 = vadd.f32 %v296, 1e-05
    %v299 = vrsqrt.pop %v298
    %v300 = vmul.f32 %v297, %v299
    %v301 = vld [vmem:[%s7] sm:$0x1]
    %v303 = vlaneseq
    %v304 = vshrl.u32 %v303, 7
    %v305 = vsub.s32 0, %v304
    %v306 = vrot.slane %v301, %v305
    %v308 = vmul.f32 %v300, %v306
    %v309 = vld [vmem:[%s8] sm:$0x1]
    %v311 = vlaneseq
    %v312 = vshrl.u32 %v311, 7
    %v313 = vsub.s32 0, %v312
    %v314 = vrot.slane %v309, %v313
    %v316 = vadd.f32 %v308, %v314
    %v317 = vmax.f32 %v316, 0.0
    %v318 = vld [vmem:[%s9] sm:$0xff]
    %v319 = vld [vmem:[%s9 + $0x8] sm:$0xff]
    %v320 = vld [vmem:[%s9 + $0x10] sm:$0xff]
    %v321 = vld [vmem:[%s9 + $0x18] sm:$0xff]
    %v322 = vld [vmem:[%s9 + $0x20] sm:$0xff]
    %v323 = vld [vmem:[%s9 + $0x28] sm:$0xff]
    %v324 = vld [vmem:[%s9 + $0x30] sm:$0xff]
    %v325 = vld [vmem:[%s9 + $0x38] sm:$0xff]
    %v326 = vld [vmem:[%s9 + $0x40] sm:$0xff]
    %v327 = vld [vmem:[%s9 + $0x48] sm:$0xff]
    %v328 = vld [vmem:[%s9 + $0x50] sm:$0xff]
    %v329 = vld [vmem:[%s9 + $0x58] sm:$0xff]
    %v330 = vld [vmem:[%s9 + $0x60] sm:$0xff]
    %v331 = vld [vmem:[%s9 + $0x68] sm:$0xff]
    %v332 = vld [vmem:[%s9 + $0x70] sm:$0xff]
    %v333 = vld [vmem:[%s9 + $0x78] sm:$0xff]
    %v334 = vld [vmem:[%s10] sm:$0x1]
    %v336 = vlaneseq
    %v337 = vshrl.u32 %v336, 7
    %v338 = vsub.s32 0, %v337
    %v339 = vrot.slane %v334, %v338
    %v342 = vsel %vm55, %v317, 0
    %v345 = vsel %vm55, %v318, 0
    %v348 = vsel %vm55, %v319, 0
    %v351 = vsel %vm55, %v320, 0
    %v354 = vsel %vm55, %v321, 0
    %v357 = vsel %vm55, %v322, 0
    %v360 = vsel %vm55, %v323, 0
    %v363 = vsel %vm55, %v324, 0
    %v366 = vsel %vm55, %v325, 0
    %v369 = vsel %vm55, %v326, 0
    %v372 = vsel %vm55, %v327, 0
    %v375 = vsel %vm55, %v328, 0
    %v378 = vsel %vm55, %v329, 0
    %v381 = vsel %vm55, %v330, 0
    %v384 = vsel %vm55, %v331, 0
    %v387 = vsel %vm55, %v332, 0
    %v390 = vsel %vm55, %v333, 0
    %392 = vmatprep.subr.mxu0 0.0
    %393 = vmatpush1.xpose.msra.mxu0 %v390
    %394 = vmatprep.subr.mxu0 0.0
    %395 = vmatpush1.xpose.msra.mxu0 %v387
    %396 = vmatprep.subr.mxu0 0.0
    %397 = vmatpush1.xpose.msra.mxu0 %v384
    %398 = vmatprep.subr.mxu0 0.0
    %399 = vmatpush1.xpose.msra.mxu0 %v381
    %400 = vmatprep.subr.mxu0 0.0
    %401 = vmatpush1.xpose.msra.mxu0 %v378
    %402 = vmatprep.subr.mxu0 0.0
    %403 = vmatpush1.xpose.msra.mxu0 %v375
    %404 = vmatprep.subr.mxu0 0.0
    %405 = vmatpush1.xpose.msra.mxu0 %v372
    %406 = vmatprep.subr.mxu0 0.0
    %407 = vmatpush1.xpose.msra.mxu0 %v369
    %408 = vmatprep.subr.mxu0 0.0
    %409 = vmatpush1.xpose.msra.mxu0 %v366
    %410 = vmatprep.subr.mxu0 0.0
    %411 = vmatpush1.xpose.msra.mxu0 %v363
    %412 = vmatprep.subr.mxu0 0.0
    %413 = vmatpush1.xpose.msra.mxu0 %v360
    %414 = vmatprep.subr.mxu0 0.0
    %415 = vmatpush1.xpose.msra.mxu0 %v357
    %416 = vmatprep.subr.mxu0 0.0
    %417 = vmatpush1.xpose.msra.mxu0 %v354
    %418 = vmatprep.subr.mxu0 0.0
    %419 = vmatpush1.xpose.msra.mxu0 %v351
    %420 = vmatprep.subr.mxu0 0.0
    %421 = vmatpush1.xpose.msra.mxu0 %v348
    %422 = vmatprep.subr.mxu0 0.0
    %423 = vmatpush1.xpose.msra.mxu0 %v345
    %424 = vmatprep.subr.mxu0 0.0
    %425 = vmatpush2.xpose.msra.mxu0 0.0
    %426 = vmatprep.subr.mxu0 0.0
    %427 = vmatpush2.xpose.msra.mxu0 0.0
    %428 = vmatprep.subr.mxu0 0.0
    %429 = vmatpush2.xpose.msra.mxu0 0.0
    %430 = vmatprep.subr.mxu0 0.0
    %431 = vmatpush2.xpose.msra.mxu0 0.0
    %432 = vmatprep.subr.mxu0 0.0
    %433 = vmatpush2.xpose.msra.mxu0 0.0
    %434 = vmatprep.subr.mxu0 0.0
    %435 = vmatpush2.xpose.msra.mxu0 0.0
    %436 = vmatprep.subr.mxu0 0.0
    %437 = vmatpush2.xpose.msra.mxu0 0.0
    %438 = vmatprep.subr.mxu0 0.0
    %439 = vmatpush2.xpose.msra.mxu0 0.0
    %440 = vmatprep.subr.mxu0 0.0
    %441 = vmatpush2.xpose.msra.mxu0 0.0
    %442 = vmatprep.subr.mxu0 0.0
    %443 = vmatpush2.xpose.msra.mxu0 0.0
    %444 = vmatprep.subr.mxu0 0.0
    %445 = vmatpush2.xpose.msra.mxu0 0.0
    %446 = vmatprep.subr.mxu0 0.0
    %447 = vmatpush2.xpose.msra.mxu0 0.0
    %448 = vmatprep.subr.mxu0 0.0
    %449 = vmatpush2.xpose.msra.mxu0 0.0
    %450 = vmatprep.subr.mxu0 0.0
    %451 = vmatpush2.xpose.msra.mxu0 0.0
    %452 = vmatprep.subr.mxu0 0.0
    %453 = vmatpush2.xpose.msra.mxu0 0.0
    %454 = vmatprep.subr.mxu0 0.0
    %455 = vmatpush2.xpose.msra.mxu0 0.0
    %456 = vmatprep.mubr.f32.mxu0 0.0
    %457 = vmatmul.mubr.f32.gmra.mxu0 %v342
    %v458 = vpop.f32.mrf.mxu0
    %v459 = vadd.f32 %v339, %v458
    %v460 = vpop.f32.mrf.mxu0
    %461 = vdwg.mxu0
    %462 = vst [vmem:[#allocation2] sm:$0xff] %v459
    // Predicated region
    $region46: #{tpu_custom_call.1} parent=1 // pred_check
      _
    $region47: #{tpu_custom_call.1} parent=1 // pred_check_branch
      %464 = sbr.rel (0) target = $region49
    $region48: #{tpu_custom_call.1} parent=1 // pred_region
      %s466 = ssub.s32 128, 128
      %467 = vsyncadd [#allocation3], %s466
      %s469 = sshll.u32 [#allocation2], 4
      %s470 = int_to_ptr.vmem [resolvable:$true] %s469
      %472 = dma.vmem_to_hbm [thread:$0]  %s470, 128, %s11, [#allocation3]
    $region49: #{tpu_custom_call.1} parent=1 // pred_fallthru
      _
    // Predicated region
    $region50: #{tpu_custom_call.1} parent=1 // pred_check
      _
    $region51: #{tpu_custom_call.1} parent=1 // pred_check_branch
      %474 = sbr.rel (0) target = $region53
    $region52: #{tpu_custom_call.1} parent=1 // pred_region
      %475 = dma.done [#allocation3], 128
    $region53: #{tpu_custom_call.1} parent=1 // pred_fallthru
      _
    %476 = vsyncpa [#allocation3], 1

</llo_original>
